<compile_context>
chip_gen: v6e
topology: v6e:2x2x1
jax: 0.10.0
libtpu: 0.0.40
codegen_flags: <defaults>
</compile_context>

<pallas_src>
import functools

import jax
import jax.numpy as jnp
from jax.experimental import pallas as pl
from jax.experimental.pallas import tpu as pltpu  # noqa: F401  (TPU backend)

H_PAD = 128        # lane-dense padded hidden size (true h_feats sliced outside)
VOCAB = 257        # 256 + 1 embedding rows
VOCAB_PAD = 384    # padded to a lane multiple for the one-hot lookup matmul


# ----------------------------- Pallas kernel ------------------------------- #

def gcn_fused_kernel(ids_ref, emb_ref, a01_ref, invdeg_ref,
                     w1_ref, wr_ref, vec_ref, out_ref):
    """Fused embedding + 4x SAGEConv('mean') + PReLU + BN(eval) + mean_nodes.

    ids_ref    : (N, 1)            i32   node ids (0..256)
    emb_ref    : (VOCAB_PAD, E)    f32   zero-padded embedding table
    a01_ref    : (N, N)            bf16  binary in-edge adjacency (exact in bf16)
    invdeg_ref : (N, 1)            f32   1 / in_degree per destination node
    w1_ref     : (E, 2*Hp)         bf16  layer-1 [W_self | W_neigh]
    wr_ref     : (L-1, Hp, 2*Hp)   bf16  layer-2..L [W_self | W_neigh]
    vec_ref    : (L, 4, Hp)        f32   per-layer [bias, prelu_alpha, bn_scale, bn_shift]
    out_ref    : (L, Hp)           f32   row l = mean over nodes of layer-(l+1) output
    """
    n = a01_ref.shape[0]
    vocab = emb_ref.shape[0]
    hpad = out_ref.shape[1]
    num_layers = vec_ref.shape[0]

    # Embedding lookup as an exact one-hot matmul (f32 x f32, MXU).
    ids = ids_ref[...]                                              # (N, 1) i32
    col = jax.lax.broadcasted_iota(jnp.int32, (n, vocab), 1)        # (N, V)
    onehot = (col == ids).astype(jnp.float32)                       # (N, V)
    h = jnp.dot(onehot, emb_ref[...],
                preferred_element_type=jnp.float32)                 # (N, E) f32

    a01 = a01_ref[...]                                              # (N, N) bf16
    inv_deg = invdeg_ref[...]                                       # (N, 1) f32
    vec = vec_ref[...]                                              # (L, 4, Hp)
    inv_n = jnp.float32(1.0 / n)

    means = []
    for li in range(num_layers):                 # unrolled (layer-1 shape differs)
        w_both = w1_ref[...] if li == 0 else wr_ref[li - 1]         # (Din, 2*Hp)
        bias, alpha = vec[li, 0:1, :], vec[li, 1:2, :]              # (1, Hp)
        scale, shift = vec[li, 2:3, :], vec[li, 3:4, :]             # (1, Hp)

        # One fused MXU matmul producing [z_self | hw] (f32 accumulation).
        zb = jnp.dot(h.astype(jnp.bfloat16), w_both,
                     preferred_element_type=jnp.float32)            # (N, 2*Hp)
        z_self = zb[:, :hpad]
        hw = zb[:, hpad:]
        # Neighbor branch (reassociated): inv_deg * (A01 @ (H @ W_neigh)).
        z_neigh = inv_deg * jnp.dot(a01, hw.astype(jnp.bfloat16),
                                    preferred_element_type=jnp.float32)
        z = z_self + z_neigh + bias
        # PReLU with per-channel slope (nn.PReLU(h_feats)); padded lanes stay 0.
        z = jnp.where(z >= 0, z, alpha * z)
        # BatchNorm1d (eval) folded into per-channel affine.
        h = scale * z + shift                                       # (N, Hp) f32
        # dgl.mean_nodes contribution of this layer.
        means.append(jnp.sum(h, axis=0, keepdims=True) * inv_n)     # (1, Hp)

    # Single lane-dense, unmasked store of all four per-layer node means.
    out_ref[...] = jnp.concatenate(means, axis=0)                   # (L, Hp)


# ------------------------------ JAX wrapper -------------------------------- #

def _full_spec(x):
    # Whole-array block: all operands total well under 1 MiB -> resident in VMEM.
    return pl.BlockSpec(x.shape, lambda: (0,) * x.ndim)


def gcn_forward(params, a01_bf16, inv_deg, in_feat, *, h_feats):
    # in_feat.long(); reshape to a (N, 1) VMEM operand; gather happens in-kernel.
    ids = in_feat.astype(jnp.int32).reshape(-1, 1)
    num_layers = params["vec"].shape[0]

    args = (ids, params["embedding"], a01_bf16, inv_deg,
            params["w1"], params["w_rest"], params["vec"])
    layer_means = pl.pallas_call(
        gcn_fused_kernel,
        out_shape=jax.ShapeDtypeStruct((num_layers, H_PAD), jnp.float32),
        in_specs=[_full_spec(x) for x in args],
        out_specs=pl.BlockSpec((num_layers, H_PAD), lambda: (0, 0)),
    )(*args)
    # mean_nodes(concat(h1..h4)) == concat(per-layer node means): slice off the
    # lane padding, then row-major reshape to the (1, 4H) graph vector.
    return layer_means[:, :h_feats].reshape(1, num_layers * h_feats)


# ------------------------- deterministic param init ------------------------ #

def init_params(key, embedding_size, h_feats, num_layers=4):
    keys = jax.random.split(key, 1 + 2 * num_layers)
    eps = 1e-5

    emb = jax.random.normal(keys[0], (VOCAB, embedding_size), jnp.float32) * 0.1
    emb_pad = jnp.zeros((VOCAB_PAD, embedding_size), jnp.float32).at[:VOCAB].set(emb)

    def pad_linear(k, din_true, din_pad):
        w = (jax.random.normal(k, (din_true, h_feats), jnp.float32)
             / jnp.sqrt(jnp.float32(din_true)))
        return (jnp.zeros((din_pad, H_PAD), jnp.float32)
                .at[:din_true, :h_feats].set(w))

    # Layer 1: Din = embedding_size; layers 2..L: Din padded to H_PAD.
    w1 = jnp.concatenate(
        [pad_linear(keys[1], embedding_size, embedding_size),
         pad_linear(keys[2], embedding_size, embedding_size)], axis=1)   # (E, 2*Hp)
    w_rest = jnp.stack(
        [jnp.concatenate([pad_linear(keys[3 + 2 * i], h_feats, H_PAD),
                          pad_linear(keys[4 + 2 * i], h_feats, H_PAD)], axis=1)
         for i in range(num_layers - 1)])                                # (L-1, Hp, 2*Hp)

    # Packed per-layer vectors: [bias, prelu_alpha, bn_scale, bn_shift].
    # BatchNorm1d defaults (eval): gamma=1, beta=0, run_mean=0, run_var=1.
    # Padded lanes: bias=0, alpha=0, scale=0, shift=0 -> padded channels stay 0.
    bias = jnp.zeros((num_layers, H_PAD), jnp.float32)
    alpha = jnp.zeros((num_layers, H_PAD), jnp.float32).at[:, :h_feats].set(0.25)
    bn_scale = (jnp.zeros((num_layers, H_PAD), jnp.float32)
                .at[:, :h_feats].set(1.0 / (1.0 + eps) ** 0.5))
    bn_shift = jnp.zeros((num_layers, H_PAD), jnp.float32)
    vec = jnp.stack([bias, alpha, bn_scale, bn_shift], axis=1)           # (L, 4, Hp)

    return {
        "embedding": emb_pad,                      # f32, exact lookup via one-hot
        "w1": w1.astype(jnp.bfloat16),
        "w_rest": w_rest.astype(jnp.bfloat16),
        "vec": vec,
    }


def ring_graph(n):
    """Binary A01 (bf16-exact) and f32 1/in_deg for a ring: edges i-1 -> i, i+1 -> i."""
    idx = jnp.arange(n)
    a01 = (jnp.zeros((n, n), jnp.float32)
           .at[idx, (idx - 1) % n].set(1.0)
           .at[idx, (idx + 1) % n].set(1.0))
    in_deg = jnp.maximum(a01.sum(axis=1, keepdims=True), 1.0)
    return a01.astype(jnp.bfloat16), (1.0 / in_deg).astype(jnp.float32)


# ----------------------------------- main ----------------------------------- #

if __name__ == "__main__":
    N = 64             # number of nodes
    EMBEDDING_SIZE = 32
    H_FEATS = 16
    # dropout = 0.1    # feat_drop: identity in eval mode
    # TODO(synk): dgl graph object replaced by dense binary adjacency + in-degree;
    # trained BN running stats / gamma / beta would be folded into vec outside.

    key = jax.random.PRNGKey(0)
    k_par, k_feat = jax.random.split(key)

    params = init_params(k_par, EMBEDDING_SIZE, H_FEATS)
    a01_bf16, inv_deg = ring_graph(N)                               # pre-cast, outside jit
    in_feat = jax.random.randint(k_feat, (N,), 0, VOCAB, jnp.int32)  # byte-ish ids

    fwd = jax.jit(functools.partial(gcn_forward, params, h_feats=H_FEATS))
    g_vec = fwd(a01_bf16, inv_deg, in_feat)
    jax.block_until_ready(g_vec)

    assert g_vec.shape == (1, 4 * H_FEATS)
    assert bool(jnp.all(jnp.isfinite(g_vec)))
    print("KERNEL_OK")
</pallas_src>

<mosaic_0001>
module attributes {stable_mosaic.version = 11 : i64} {
  func.func @gcn_fused_kernel(%arg0: memref<64x1xi32, #tpu.memory_space<vmem>>, %arg1: memref<384x32xf32, #tpu.memory_space<vmem>>, %arg2: memref<64x64xbf16, #tpu.memory_space<vmem>>, %arg3: memref<64x1xf32, #tpu.memory_space<vmem>>, %arg4: memref<32x256xbf16, #tpu.memory_space<vmem>>, %arg5: memref<3x128x256xbf16, #tpu.memory_space<vmem>>, %arg6: memref<4x4x128xf32, #tpu.memory_space<vmem>>, %arg7: memref<4x128xf32, #tpu.memory_space<vmem>>) attributes {dimension_semantics = [], scalar_prefetch = 0 : i64, scratch_operands = 0 : i64, tpu.core_type = #tpu.core_type<tc>} {
    %c0 = arith.constant 0 : index
    %c0_0 = arith.constant 0 : index
    %0 = vector.load %arg0[%c0, %c0_0] : memref<64x1xi32, #tpu.memory_space<vmem>>, vector<64x1xi32>
    %1 = tpu.iota {dimensions = array<i32: 1>} : vector<64x384xi32>
    %2 = vector.broadcast %0 : vector<64x1xi32> to vector<64x384xi32>
    %3 = arith.cmpi eq, %1, %2 : vector<64x384xi32>
    %4 = arith.extui %3 : vector<64x384xi1> to vector<64x384xi32>
    %5 = arith.sitofp %4 : vector<64x384xi32> to vector<64x384xf32>
    %c0_1 = arith.constant 0 : index
    %c0_2 = arith.constant 0 : index
    %6 = vector.load %arg1[%c0_1, %c0_2] : memref<384x32xf32, #tpu.memory_space<vmem>>, vector<384x32xf32>
    %cst = arith.constant dense<0.000000e+00> : vector<64x32xf32>
    %7 = tpu.matmul %5, %6, %cst {dimension_numbers = #tpu.dot_dimension_numbers<[1], [0], [0], [1], [0, 0, 1, 1], [], []>} : vector<64x384xf32>, vector<384x32xf32>, vector<64x32xf32> -> vector<64x32xf32>
    %c0_3 = arith.constant 0 : index
    %c0_4 = arith.constant 0 : index
    %8 = vector.load %arg2[%c0_3, %c0_4] : memref<64x64xbf16, #tpu.memory_space<vmem>>, vector<64x64xbf16>
    %c0_5 = arith.constant 0 : index
    %c0_6 = arith.constant 0 : index
    %9 = vector.load %arg3[%c0_5, %c0_6] : memref<64x1xf32, #tpu.memory_space<vmem>>, vector<64x1xf32>
    %c0_7 = arith.constant 0 : index
    %c0_8 = arith.constant 0 : index
    %c0_9 = arith.constant 0 : index
    %10 = vector.load %arg6[%c0_7, %c0_8, %c0_9] : memref<4x4x128xf32, #tpu.memory_space<vmem>>, vector<4x4x128xf32>
    %c0_10 = arith.constant 0 : index
    %c0_11 = arith.constant 0 : index
    %11 = vector.load %arg4[%c0_10, %c0_11] : memref<32x256xbf16, #tpu.memory_space<vmem>>, vector<32x256xbf16>
    %12 = vector.extract_strided_slice %10 {offsets = [0, 0, 0], sizes = [1, 1, 128], strides = [1, 1, 1]} : vector<4x4x128xf32> to vector<1x1x128xf32>
    %13 = vector.shape_cast %12 : vector<1x1x128xf32> to vector<1x128xf32>
    %14 = vector.extract_strided_slice %10 {offsets = [0, 1, 0], sizes = [1, 1, 128], strides = [1, 1, 1]} : vector<4x4x128xf32> to vector<1x1x128xf32>
    %15 = vector.shape_cast %14 : vector<1x1x128xf32> to vector<1x128xf32>
    %16 = vector.extract_strided_slice %10 {offsets = [0, 2, 0], sizes = [1, 1, 128], strides = [1, 1, 1]} : vector<4x4x128xf32> to vector<1x1x128xf32>
    %17 = vector.shape_cast %16 : vector<1x1x128xf32> to vector<1x128xf32>
    %18 = vector.extract_strided_slice %10 {offsets = [0, 3, 0], sizes = [1, 1, 128], strides = [1, 1, 1]} : vector<4x4x128xf32> to vector<1x1x128xf32>
    %19 = vector.shape_cast %18 : vector<1x1x128xf32> to vector<1x128xf32>
    %20 = arith.truncf %7 : vector<64x32xf32> to vector<64x32xbf16>
    %cst_12 = arith.constant dense<0.000000e+00> : vector<64x256xf32>
    %21 = tpu.matmul %20, %11, %cst_12 {dimension_numbers = #tpu.dot_dimension_numbers<[1], [0], [0], [1], [0, 0, 1, 1], [], []>} : vector<64x32xbf16>, vector<32x256xbf16>, vector<64x256xf32> -> vector<64x256xf32>
    %22 = vector.extract_strided_slice %21 {offsets = [0, 0], sizes = [64, 128], strides = [1, 1]} : vector<64x256xf32> to vector<64x128xf32>
    %23 = vector.extract_strided_slice %21 {offsets = [0, 128], sizes = [64, 128], strides = [1, 1]} : vector<64x256xf32> to vector<64x128xf32>
    %24 = arith.truncf %23 : vector<64x128xf32> to vector<64x128xbf16>
    %cst_13 = arith.constant dense<0.000000e+00> : vector<64x128xf32>
    %25 = tpu.matmul %8, %24, %cst_13 {dimension_numbers = #tpu.dot_dimension_numbers<[1], [0], [0], [1], [0, 0, 1, 1], [], []>} : vector<64x64xbf16>, vector<64x128xbf16>, vector<64x128xf32> -> vector<64x128xf32>
    %26 = vector.broadcast %9 : vector<64x1xf32> to vector<64x128xf32>
    %27 = arith.mulf %26, %25 : vector<64x128xf32>
    %28 = arith.addf %22, %27 : vector<64x128xf32>
    %29 = vector.broadcast %13 : vector<1x128xf32> to vector<64x128xf32>
    %30 = arith.addf %28, %29 : vector<64x128xf32>
    %cst_14 = arith.constant 0.000000e+00 : f32
    %31 = vector.broadcast %cst_14 : f32 to vector<64x128xf32>
    %32 = arith.cmpf oge, %30, %31 : vector<64x128xf32>
    %33 = vector.broadcast %15 : vector<1x128xf32> to vector<64x128xf32>
    %34 = arith.mulf %33, %30 : vector<64x128xf32>
    %35 = arith.select %32, %30, %34 : vector<64x128xi1>, vector<64x128xf32>
    %36 = vector.broadcast %17 : vector<1x128xf32> to vector<64x128xf32>
    %37 = arith.mulf %36, %35 : vector<64x128xf32>
    %38 = vector.broadcast %19 : vector<1x128xf32> to vector<64x128xf32>
    %39 = arith.addf %37, %38 : vector<64x128xf32>
    %cst_15 = arith.constant dense<0.000000e+00> : vector<128xf32>
    %40 = vector.multi_reduction <add>, %39, %cst_15 [0] : vector<64x128xf32> to vector<128xf32>
    %41 = vector.shape_cast %40 : vector<128xf32> to vector<1x128xf32>
    %cst_16 = arith.constant 1.562500e-02 : f32
    %42 = vector.broadcast %cst_16 : f32 to vector<1x128xf32>
    %43 = arith.mulf %41, %42 : vector<1x128xf32>
    %c0_17 = arith.constant 0 : index
    %c0_18 = arith.constant 0 : index
    %c0_19 = arith.constant 0 : index
    %44 = vector.load %arg5[%c0_17, %c0_18, %c0_19] : memref<3x128x256xbf16, #tpu.memory_space<vmem>>, vector<1x128x256xbf16>
    %45 = vector.shape_cast %44 : vector<1x128x256xbf16> to vector<128x256xbf16>
    %46 = vector.extract_strided_slice %10 {offsets = [1, 0, 0], sizes = [1, 1, 128], strides = [1, 1, 1]} : vector<4x4x128xf32> to vector<1x1x128xf32>
    %47 = vector.shape_cast %46 : vector<1x1x128xf32> to vector<1x128xf32>
    %48 = vector.extract_strided_slice %10 {offsets = [1, 1, 0], sizes = [1, 1, 128], strides = [1, 1, 1]} : vector<4x4x128xf32> to vector<1x1x128xf32>
    %49 = vector.shape_cast %48 : vector<1x1x128xf32> to vector<1x128xf32>
    %50 = vector.extract_strided_slice %10 {offsets = [1, 2, 0], sizes = [1, 1, 128], strides = [1, 1, 1]} : vector<4x4x128xf32> to vector<1x1x128xf32>
    %51 = vector.shape_cast %50 : vector<1x1x128xf32> to vector<1x128xf32>
    %52 = vector.extract_strided_slice %10 {offsets = [1, 3, 0], sizes = [1, 1, 128], strides = [1, 1, 1]} : vector<4x4x128xf32> to vector<1x1x128xf32>
    %53 = vector.shape_cast %52 : vector<1x1x128xf32> to vector<1x128xf32>
    %54 = arith.truncf %39 : vector<64x128xf32> to vector<64x128xbf16>
    %cst_20 = arith.constant dense<0.000000e+00> : vector<64x256xf32>
    %55 = tpu.matmul %54, %45, %cst_20 {dimension_numbers = #tpu.dot_dimension_numbers<[1], [0], [0], [1], [0, 0, 1, 1], [], []>} : vector<64x128xbf16>, vector<128x256xbf16>, vector<64x256xf32> -> vector<64x256xf32>
    %56 = vector.extract_strided_slice %55 {offsets = [0, 0], sizes = [64, 128], strides = [1, 1]} : vector<64x256xf32> to vector<64x128xf32>
    %57 = vector.extract_strided_slice %55 {offsets = [0, 128], sizes = [64, 128], strides = [1, 1]} : vector<64x256xf32> to vector<64x128xf32>
    %58 = arith.truncf %57 : vector<64x128xf32> to vector<64x128xbf16>
    %cst_21 = arith.constant dense<0.000000e+00> : vector<64x128xf32>
    %59 = tpu.matmul %8, %58, %cst_21 {dimension_numbers = #tpu.dot_dimension_numbers<[1], [0], [0], [1], [0, 0, 1, 1], [], []>} : vector<64x64xbf16>, vector<64x128xbf16>, vector<64x128xf32> -> vector<64x128xf32>
    %60 = vector.broadcast %9 : vector<64x1xf32> to vector<64x128xf32>
    %61 = arith.mulf %60, %59 : vector<64x128xf32>
    %62 = arith.addf %56, %61 : vector<64x128xf32>
    %63 = vector.broadcast %47 : vector<1x128xf32> to vector<64x128xf32>
    %64 = arith.addf %62, %63 : vector<64x128xf32>
    %cst_22 = arith.constant 0.000000e+00 : f32
    %65 = vector.broadcast %cst_22 : f32 to vector<64x128xf32>
    %66 = arith.cmpf oge, %64, %65 : vector<64x128xf32>
    %67 = vector.broadcast %49 : vector<1x128xf32> to vector<64x128xf32>
    %68 = arith.mulf %67, %64 : vector<64x128xf32>
    %69 = arith.select %66, %64, %68 : vector<64x128xi1>, vector<64x128xf32>
    %70 = vector.broadcast %51 : vector<1x128xf32> to vector<64x128xf32>
    %71 = arith.mulf %70, %69 : vector<64x128xf32>
    %72 = vector.broadcast %53 : vector<1x128xf32> to vector<64x128xf32>
    %73 = arith.addf %71, %72 : vector<64x128xf32>
    %cst_23 = arith.constant dense<0.000000e+00> : vector<128xf32>
    %74 = vector.multi_reduction <add>, %73, %cst_23 [0] : vector<64x128xf32> to vector<128xf32>
    %75 = vector.shape_cast %74 : vector<128xf32> to vector<1x128xf32>
    %cst_24 = arith.constant 1.562500e-02 : f32
    %76 = vector.broadcast %cst_24 : f32 to vector<1x128xf32>
    %77 = arith.mulf %75, %76 : vector<1x128xf32>
    %c1 = arith.constant 1 : index
    %c0_25 = arith.constant 0 : index
    %c0_26 = arith.constant 0 : index
    %78 = vector.load %arg5[%c1, %c0_25, %c0_26] : memref<3x128x256xbf16, #tpu.memory_space<vmem>>, vector<1x128x256xbf16>
    %79 = vector.shape_cast %78 : vector<1x128x256xbf16> to vector<128x256xbf16>
    %80 = vector.extract_strided_slice %10 {offsets = [2, 0, 0], sizes = [1, 1, 128], strides = [1, 1, 1]} : vector<4x4x128xf32> to vector<1x1x128xf32>
    %81 = vector.shape_cast %80 : vector<1x1x128xf32> to vector<1x128xf32>
    %82 = vector.extract_strided_slice %10 {offsets = [2, 1, 0], sizes = [1, 1, 128], strides = [1, 1, 1]} : vector<4x4x128xf32> to vector<1x1x128xf32>
    %83 = vector.shape_cast %82 : vector<1x1x128xf32> to vector<1x128xf32>
    %84 = vector.extract_strided_slice %10 {offsets = [2, 2, 0], sizes = [1, 1, 128], strides = [1, 1, 1]} : vector<4x4x128xf32> to vector<1x1x128xf32>
    %85 = vector.shape_cast %84 : vector<1x1x128xf32> to vector<1x128xf32>
    %86 = vector.extract_strided_slice %10 {offsets = [2, 3, 0], sizes = [1, 1, 128], strides = [1, 1, 1]} : vector<4x4x128xf32> to vector<1x1x128xf32>
    %87 = vector.shape_cast %86 : vector<1x1x128xf32> to vector<1x128xf32>
    %88 = arith.truncf %73 : vector<64x128xf32> to vector<64x128xbf16>
    %cst_27 = arith.constant dense<0.000000e+00> : vector<64x256xf32>
    %89 = tpu.matmul %88, %79, %cst_27 {dimension_numbers = #tpu.dot_dimension_numbers<[1], [0], [0], [1], [0, 0, 1, 1], [], []>} : vector<64x128xbf16>, vector<128x256xbf16>, vector<64x256xf32> -> vector<64x256xf32>
    %90 = vector.extract_strided_slice %89 {offsets = [0, 0], sizes = [64, 128], strides = [1, 1]} : vector<64x256xf32> to vector<64x128xf32>
    %91 = vector.extract_strided_slice %89 {offsets = [0, 128], sizes = [64, 128], strides = [1, 1]} : vector<64x256xf32> to vector<64x128xf32>
    %92 = arith.truncf %91 : vector<64x128xf32> to vector<64x128xbf16>
    %cst_28 = arith.constant dense<0.000000e+00> : vector<64x128xf32>
    %93 = tpu.matmul %8, %92, %cst_28 {dimension_numbers = #tpu.dot_dimension_numbers<[1], [0], [0], [1], [0, 0, 1, 1], [], []>} : vector<64x64xbf16>, vector<64x128xbf16>, vector<64x128xf32> -> vector<64x128xf32>
    %94 = vector.broadcast %9 : vector<64x1xf32> to vector<64x128xf32>
    %95 = arith.mulf %94, %93 : vector<64x128xf32>
    %96 = arith.addf %90, %95 : vector<64x128xf32>
    %97 = vector.broadcast %81 : vector<1x128xf32> to vector<64x128xf32>
    %98 = arith.addf %96, %97 : vector<64x128xf32>
    %cst_29 = arith.constant 0.000000e+00 : f32
    %99 = vector.broadcast %cst_29 : f32 to vector<64x128xf32>
    %100 = arith.cmpf oge, %98, %99 : vector<64x128xf32>
    %101 = vector.broadcast %83 : vector<1x128xf32> to vector<64x128xf32>
    %102 = arith.mulf %101, %98 : vector<64x128xf32>
    %103 = arith.select %100, %98, %102 : vector<64x128xi1>, vector<64x128xf32>
    %104 = vector.broadcast %85 : vector<1x128xf32> to vector<64x128xf32>
    %105 = arith.mulf %104, %103 : vector<64x128xf32>
    %106 = vector.broadcast %87 : vector<1x128xf32> to vector<64x128xf32>
    %107 = arith.addf %105, %106 : vector<64x128xf32>
    %cst_30 = arith.constant dense<0.000000e+00> : vector<128xf32>
    %108 = vector.multi_reduction <add>, %107, %cst_30 [0] : vector<64x128xf32> to vector<128xf32>
    %109 = vector.shape_cast %108 : vector<128xf32> to vector<1x128xf32>
    %cst_31 = arith.constant 1.562500e-02 : f32
    %110 = vector.broadcast %cst_31 : f32 to vector<1x128xf32>
    %111 = arith.mulf %109, %110 : vector<1x128xf32>
    %c2 = arith.constant 2 : index
    %c0_32 = arith.constant 0 : index
    %c0_33 = arith.constant 0 : index
    %112 = vector.load %arg5[%c2, %c0_32, %c0_33] : memref<3x128x256xbf16, #tpu.memory_space<vmem>>, vector<1x128x256xbf16>
    %113 = vector.shape_cast %112 : vector<1x128x256xbf16> to vector<128x256xbf16>
    %114 = vector.extract_strided_slice %10 {offsets = [3, 0, 0], sizes = [1, 1, 128], strides = [1, 1, 1]} : vector<4x4x128xf32> to vector<1x1x128xf32>
    %115 = vector.shape_cast %114 : vector<1x1x128xf32> to vector<1x128xf32>
    %116 = vector.extract_strided_slice %10 {offsets = [3, 1, 0], sizes = [1, 1, 128], strides = [1, 1, 1]} : vector<4x4x128xf32> to vector<1x1x128xf32>
    %117 = vector.shape_cast %116 : vector<1x1x128xf32> to vector<1x128xf32>
    %118 = vector.extract_strided_slice %10 {offsets = [3, 2, 0], sizes = [1, 1, 128], strides = [1, 1, 1]} : vector<4x4x128xf32> to vector<1x1x128xf32>
    %119 = vector.shape_cast %118 : vector<1x1x128xf32> to vector<1x128xf32>
    %120 = vector.extract_strided_slice %10 {offsets = [3, 3, 0], sizes = [1, 1, 128], strides = [1, 1, 1]} : vector<4x4x128xf32> to vector<1x1x128xf32>
    %121 = vector.shape_cast %120 : vector<1x1x128xf32> to vector<1x128xf32>
    %122 = arith.truncf %107 : vector<64x128xf32> to vector<64x128xbf16>
    %cst_34 = arith.constant dense<0.000000e+00> : vector<64x256xf32>
    %123 = tpu.matmul %122, %113, %cst_34 {dimension_numbers = #tpu.dot_dimension_numbers<[1], [0], [0], [1], [0, 0, 1, 1], [], []>} : vector<64x128xbf16>, vector<128x256xbf16>, vector<64x256xf32> -> vector<64x256xf32>
    %124 = vector.extract_strided_slice %123 {offsets = [0, 0], sizes = [64, 128], strides = [1, 1]} : vector<64x256xf32> to vector<64x128xf32>
    %125 = vector.extract_strided_slice %123 {offsets = [0, 128], sizes = [64, 128], strides = [1, 1]} : vector<64x256xf32> to vector<64x128xf32>
    %126 = arith.truncf %125 : vector<64x128xf32> to vector<64x128xbf16>
    %cst_35 = arith.constant dense<0.000000e+00> : vector<64x128xf32>
    %127 = tpu.matmul %8, %126, %cst_35 {dimension_numbers = #tpu.dot_dimension_numbers<[1], [0], [0], [1], [0, 0, 1, 1], [], []>} : vector<64x64xbf16>, vector<64x128xbf16>, vector<64x128xf32> -> vector<64x128xf32>
    %128 = vector.broadcast %9 : vector<64x1xf32> to vector<64x128xf32>
    %129 = arith.mulf %128, %127 : vector<64x128xf32>
    %130 = arith.addf %124, %129 : vector<64x128xf32>
    %131 = vector.broadcast %115 : vector<1x128xf32> to vector<64x128xf32>
    %132 = arith.addf %130, %131 : vector<64x128xf32>
    %cst_36 = arith.constant 0.000000e+00 : f32
    %133 = vector.broadcast %cst_36 : f32 to vector<64x128xf32>
    %134 = arith.cmpf oge, %132, %133 : vector<64x128xf32>
    %135 = vector.broadcast %117 : vector<1x128xf32> to vector<64x128xf32>
    %136 = arith.mulf %135, %132 : vector<64x128xf32>
    %137 = arith.select %134, %132, %136 : vector<64x128xi1>, vector<64x128xf32>
    %138 = vector.broadcast %119 : vector<1x128xf32> to vector<64x128xf32>
    %139 = arith.mulf %138, %137 : vector<64x128xf32>
    %140 = vector.broadcast %121 : vector<1x128xf32> to vector<64x128xf32>
    %141 = arith.addf %139, %140 : vector<64x128xf32>
    %cst_37 = arith.constant dense<0.000000e+00> : vector<128xf32>
    %142 = vector.multi_reduction <add>, %141, %cst_37 [0] : vector<64x128xf32> to vector<128xf32>
    %143 = vector.shape_cast %142 : vector<128xf32> to vector<1x128xf32>
    %cst_38 = arith.constant 1.562500e-02 : f32
    %144 = vector.broadcast %cst_38 : f32 to vector<1x128xf32>
    %145 = arith.mulf %143, %144 : vector<1x128xf32>
    %146 = tpu.concatenate %43, %77, %111, %145 in 0 : vector<1x128xf32>, vector<1x128xf32>, vector<1x128xf32>, vector<1x128xf32> -> vector<4x128xf32>
    %c0_39 = arith.constant 0 : index
    %c0_40 = arith.constant 0 : index
    %147 = vector.load %arg7[%c0_39, %c0_40] : memref<4x128xf32, #tpu.memory_space<vmem>>, vector<4x128xf32>
    tpu.vector_store %arg7[%c0_39, %c0_40], %146 {strides = array<i32>} : memref<4x128xf32, #tpu.memory_space<vmem>>, vector<4x128xf32>,
    return
  }
}

</mosaic_0001>

<llo_original>
// kernel: gcn_forward.1
$region0: #{gcn_forward.1}
  #allocation0 [shape = 'u32[]', space=smem, size = 0x4, offset = 0x4, fixed_abs, tag = 'smem constant byte address 0x4 - core index']
  #allocation1 [shape = 'u32[144,128]{1,0:T(1,128)}', space=vmem, size = 0x12000, scoped, tag = 'internal scratch']
  %s0 = inlined_call_operand.vmem [shape: s32[64,1], index: 0, kind: input, shape index: {}]
  %s1 = inlined_call_operand.hbm [shape: f32[384,32], index: 1, kind: input, shape index: {}]
  %s2 = inlined_call_operand.vmem [shape: bf16[64,64], index: 2, kind: input, shape index: {}]
  %s3 = inlined_call_operand.vmem [shape: f32[64,1], index: 3, kind: input, shape index: {}]
  %s4 = inlined_call_operand.vmem [shape: bf16[32,256], index: 4, kind: input, shape index: {}]
  %s5 = inlined_call_operand.hbm [shape: bf16[3,128,256], index: 5, kind: input, shape index: {}]
  %s6 = inlined_call_operand.vmem [shape: f32[4,4,128], index: 6, kind: input, shape index: {}]
  %s7 = inlined_call_operand.vmem [shape: f32[4,128], index: 7, kind: output, shape index: {}]
  %s8 = sld [smem:[#allocation0]]
  $region46: #{gcn_forward.1} parent=0
    _
  %s10 = ssub.s32 1, %s8
  %s11 = scalar_select 0, %s10, %s8
  $region1: #{gcn_forward.1} parent=0
    #allocation2 [shape = 'u8[196608]{0}', space=vmem, size = 0x30000, scoped, tag = 'input window, operand 1, single buffered']
    #allocation3 [shape = 's32[1]{0}', space=sflag, size = 0x4, scoped, tag = 'scoped memory for gcn_forward.1']
    #allocation4 [shape = 'u8[196608]{0}', space=vmem, size = 0x30000, scoped, tag = 'input window, operand 5, single buffered']
    #allocation5 [shape = 's32[1]{0}', space=sflag, size = 0x4, scoped, tag = 'scoped memory for gcn_forward.1']
    %12 = vsyncpa [#allocation3], 0
    %13 = vsyncpa [#allocation5], 0
    // Predicated region
    $region2: #{gcn_forward.1} parent=1 // pred_check
      _
    $region3: #{gcn_forward.1} parent=1 // pred_check_branch
      %15 = sbr.rel (0) target = $region5
    $region4: #{gcn_forward.1} parent=1 // pred_region
      _
    $region5: #{gcn_forward.1} parent=1 // pred_fallthru
      _
    // Predicated region
    $region6: #{gcn_forward.1} parent=1 // pred_check
      _
    $region7: #{gcn_forward.1} parent=1 // pred_check_branch
      %17 = sbr.rel (0) target = $region9
    $region8: #{gcn_forward.1} parent=1 // pred_region
      %s19 = ssub.s32 6144, 6144
      %20 = vsyncadd [#allocation3], %s19
      %s21 = sshll.u32 [#allocation2], 4
      %s22 = int_to_ptr.vmem [resolvable:$true] %s21
      %27 = dma.hbm_to_vmem [thread:$0]  %s1, 6144, %s22, [#allocation3], 128, 128, 8
    $region9: #{gcn_forward.1} parent=1 // pred_fallthru
      _
    // Predicated region
    $region10: #{gcn_forward.1} parent=1 // pred_check
      _
    $region11: #{gcn_forward.1} parent=1 // pred_check_branch
      %29 = sbr.rel (0) target = $region13
    $region12: #{gcn_forward.1} parent=1 // pred_region
      _
    $region13: #{gcn_forward.1} parent=1 // pred_fallthru
      _
    // Predicated region
    $region14: #{gcn_forward.1} parent=1 // pred_check
      _
    $region15: #{gcn_forward.1} parent=1 // pred_check_branch
      %31 = sbr.rel (0) target = $region17
    $region16: #{gcn_forward.1} parent=1 // pred_region
      _
    $region17: #{gcn_forward.1} parent=1 // pred_fallthru
      _
    // Predicated region
    $region18: #{gcn_forward.1} parent=1 // pred_check
      _
    $region19: #{gcn_forward.1} parent=1 // pred_check_branch
      %33 = sbr.rel (0) target = $region21
    $region20: #{gcn_forward.1} parent=1 // pred_region
      _
    $region21: #{gcn_forward.1} parent=1 // pred_fallthru
      _
    // Predicated region
    $region22: #{gcn_forward.1} parent=1 // pred_check
      _
    $region23: #{gcn_forward.1} parent=1 // pred_check_branch
      %35 = sbr.rel (0) target = $region25
    $region24: #{gcn_forward.1} parent=1 // pred_region
      %s37 = ssub.s32 6144, 6144
      %38 = vsyncadd [#allocation5], %s37
      %s39 = sshll.u32 [#allocation4], 4
      %s40 = int_to_ptr.vmem [resolvable:$true] %s39
      %45 = dma.hbm_to_vmem [thread:$0]  %s5, 6144, %s40, [#allocation5], 128, 128, 8
    $region25: #{gcn_forward.1} parent=1 // pred_fallthru
      _
    // Predicated region
    $region26: #{gcn_forward.1} parent=1 // pred_check
      _
    $region27: #{gcn_forward.1} parent=1 // pred_check_branch
      %47 = sbr.rel (0) target = $region29
    $region28: #{gcn_forward.1} parent=1 // pred_region
      _
    $region29: #{gcn_forward.1} parent=1 // pred_fallthru
      _
    // Predicated region
    $region30: #{gcn_forward.1} parent=1 // pred_check
      _
    $region31: #{gcn_forward.1} parent=1 // pred_check_branch
      %49 = sbr.rel (0) target = $region33
    $region32: #{gcn_forward.1} parent=1 // pred_region
      %50 = dma.done [#allocation3], 6144
    $region33: #{gcn_forward.1} parent=1 // pred_fallthru
      _
    // Predicated region
    $region34: #{gcn_forward.1} parent=1 // pred_check
      _
    $region35: #{gcn_forward.1} parent=1 // pred_check_branch
      %52 = sbr.rel (0) target = $region37
    $region36: #{gcn_forward.1} parent=1 // pred_region
      %53 = dma.done [#allocation5], 6144
    $region37: #{gcn_forward.1} parent=1 // pred_fallthru
      _
    %v55 = vld [vmem:[%s0] sm:$0xff]
    %v56 = vld [vmem:[%s0 + $0x8] sm:$0xff]
    %v57 = vld [vmem:[%s0 + $0x10] sm:$0xff]
    %v58 = vld [vmem:[%s0 + $0x18] sm:$0xff]
    %v59 = vld [vmem:[%s0 + $0x20] sm:$0xff]
    %v60 = vld [vmem:[%s0 + $0x28] sm:$0xff]
    %v61 = vld [vmem:[%s0 + $0x30] sm:$0xff]
    %v62 = vld [vmem:[%s0 + $0x38] sm:$0xff]
    %v63 = vlaneseq
    %v64 = vand.u32 %v63, 127
    %v65 = vadd.s32 %v64, 128
    %v66 = vadd.s32 %v64, 256
    %67 = vset.pattern.permute.xlu0 0
    %68 = vperm.xlu0 %67, %v55
    %v69 = vpop.permute.xlu0 %68
    %70 = vset.pattern.permute.xlu0 0
    %71 = vperm.xlu0 %70, %v56
    %v72 = vpop.permute.xlu0 %71
    %73 = vset.pattern.permute.xlu0 0
    %74 = vperm.xlu0 %73, %v57
    %v75 = vpop.permute.xlu0 %74
    %76 = vset.pattern.permute.xlu0 0
    %77 = vperm.xlu0 %76, %v58
    %v78 = vpop.permute.xlu0 %77
    %79 = vset.pattern.permute.xlu0 0
    %80 = vperm.xlu0 %79, %v59
    %v81 = vpop.permute.xlu0 %80
    %82 = vset.pattern.permute.xlu0 0
    %83 = vperm.xlu0 %82, %v60
    %v84 = vpop.permute.xlu0 %83
    %85 = vset.pattern.permute.xlu0 0
    %86 = vperm.xlu0 %85, %v61
    %v87 = vpop.permute.xlu0 %86
    %88 = vset.pattern.permute.xlu0 0
    %89 = vperm.xlu0 %88, %v62
    %v90 = vpop.permute.xlu0 %89
    %vm91 = vcmp.eq.s32.totalorder %v64, %v69
    %vm92 = vcmp.eq.s32.totalorder %v65, %v69
    %vm93 = vcmp.eq.s32.totalorder %v66, %v69
    %vm94 = vcmp.eq.s32.totalorder %v64, %v72
    %vm95 = vcmp.eq.s32.totalorder %v65, %v72
    %vm96 = vcmp.eq.s32.totalorder %v66, %v72
    %vm97 = vcmp.eq.s32.totalorder %v64, %v75
    %vm98 = vcmp.eq.s32.totalorder %v65, %v75
    %vm99 = vcmp.eq.s32.totalorder %v66, %v75
    %vm100 = vcmp.eq.s32.totalorder %v64, %v78
    %vm101 = vcmp.eq.s32.totalorder %v65, %v78
    %vm102 = vcmp.eq.s32.totalorder %v66, %v78
    %vm103 = vcmp.eq.s32.totalorder %v64, %v81
    %vm104 = vcmp.eq.s32.totalorder %v65, %v81
    %vm105 = vcmp.eq.s32.totalorder %v66, %v81
    %vm106 = vcmp.eq.s32.totalorder %v64, %v84
    %vm107 = vcmp.eq.s32.totalorder %v65, %v84
    %vm108 = vcmp.eq.s32.totalorder %v66, %v84
    %vm109 = vcmp.eq.s32.totalorder %v64, %v87
    %vm110 = vcmp.eq.s32.totalorder %v65, %v87
    %vm111 = vcmp.eq.s32.totalorder %v66, %v87
    %vm112 = vcmp.eq.s32.totalorder %v64, %v90
    %vm113 = vcmp.eq.s32.totalorder %v65, %v90
    %vm114 = vcmp.eq.s32.totalorder %v66, %v90
    %v115 = vsel %vm91, 1, 0
    %v116 = vsel %vm92, 1, 0
    %v117 = vsel %vm93, 1, 0
    %v118 = vsel %vm94, 1, 0
    %v119 = vsel %vm95, 1, 0
    %v120 = vsel %vm96, 1, 0
    %v121 = vsel %vm97, 1, 0
    %v122 = vsel %vm98, 1, 0
    %v123 = vsel %vm99, 1, 0
    %v124 = vsel %vm100, 1, 0
    %v125 = vsel %vm101, 1, 0
    %v126 = vsel %vm102, 1, 0
    %v127 = vsel %vm103, 1, 0
    %v128 = vsel %vm104, 1, 0
    %v129 = vsel %vm105, 1, 0
    %v130 = vsel %vm106, 1, 0
    %v131 = vsel %vm107, 1, 0
    %v132 = vsel %vm108, 1, 0
    %v133 = vsel %vm109, 1, 0
    %v134 = vsel %vm110, 1, 0
    %v135 = vsel %vm111, 1, 0
    %v136 = vsel %vm112, 1, 0
    %v137 = vsel %vm113, 1, 0
    %v138 = vsel %vm114, 1, 0
    %v139 = vcvt.s32.f32 %v115
    %v140 = vcvt.s32.f32 %v116
    %v141 = vcvt.s32.f32 %v117
    %v142 = vcvt.s32.f32 %v118
    %v143 = vcvt.s32.f32 %v119
    %v144 = vcvt.s32.f32 %v120
    %v145 = vcvt.s32.f32 %v121
    %v146 = vcvt.s32.f32 %v122
    %v147 = vcvt.s32.f32 %v123
    %v148 = vcvt.s32.f32 %v124
    %v149 = vcvt.s32.f32 %v125
    %v150 = vcvt.s32.f32 %v126
    %v151 = vcvt.s32.f32 %v127
    %v152 = vcvt.s32.f32 %v128
    %v153 = vcvt.s32.f32 %v129
    %v154 = vcvt.s32.f32 %v130
    %v155 = vcvt.s32.f32 %v131
    %v156 = vcvt.s32.f32 %v132
    %v157 = vcvt.s32.f32 %v133
    %v158 = vcvt.s32.f32 %v134
    %v159 = vcvt.s32.f32 %v135
    %v160 = vcvt.s32.f32 %v136
    %v161 = vcvt.s32.f32 %v137
    %v162 = vcvt.s32.f32 %v138
    %v163 = vld [vmem:[#allocation2] sm:$0xff]
    %v164 = vld [vmem:[#allocation2 + $0x8] sm:$0xff]
    %v165 = vld [vmem:[#allocation2 + $0x10] sm:$0xff]
    %v166 = vld [vmem:[#allocation2 + $0x18] sm:$0xff]
    %v167 = vld [vmem:[#allocation2 + $0x20] sm:$0xff]
    %v168 = vld [vmem:[#allocation2 + $0x28] sm:$0xff]
    %v169 = vld [vmem:[#allocation2 + $0x30] sm:$0xff]
    %v170 = vld [vmem:[#allocation2 + $0x38] sm:$0xff]
    %v171 = vld [vmem:[#allocation2 + $0x40] sm:$0xff]
    %v172 = vld [vmem:[#allocation2 + $0x48] sm:$0xff]
    %v173 = vld [vmem:[#allocation2 + $0x50] sm:$0xff]
    %v174 = vld [vmem:[#allocation2 + $0x58] sm:$0xff]
    %v175 = vld [vmem:[#allocation2 + $0x60] sm:$0xff]
    %v176 = vld [vmem:[#allocation2 + $0x68] sm:$0xff]
    %v177 = vld [vmem:[#allocation2 + $0x70] sm:$0xff]
    %v178 = vld [vmem:[#allocation2 + $0x78] sm:$0xff]
    %v179 = vld [vmem:[#allocation2 + $0x80] sm:$0xff]
    %v180 = vld [vmem:[#allocation2 + $0x88] sm:$0xff]
    %v181 = vld [vmem:[#allocation2 + $0x90] sm:$0xff]
    %v182 = vld [vmem:[#allocation2 + $0x98] sm:$0xff]
    %v183 = vld [vmem:[#allocation2 + $0xa0] sm:$0xff]
    %v184 = vld [vmem:[#allocation2 + $0xa8] sm:$0xff]
    %v185 = vld [vmem:[#allocation2 + $0xb0] sm:$0xff]
    %v186 = vld [vmem:[#allocation2 + $0xb8] sm:$0xff]
    %v187 = vld [vmem:[#allocation2 + $0xc0] sm:$0xff]
    %v188 = vld [vmem:[#allocation2 + $0xc8] sm:$0xff]
    %v189 = vld [vmem:[#allocation2 + $0xd0] sm:$0xff]
    %v190 = vld [vmem:[#allocation2 + $0xd8] sm:$0xff]
    %v191 = vld [vmem:[#allocation2 + $0xe0] sm:$0xff]
    %v192 = vld [vmem:[#allocation2 + $0xe8] sm:$0xff]
    %v193 = vld [vmem:[#allocation2 + $0xf0] sm:$0xff]
    %v194 = vld [vmem:[#allocation2 + $0xf8] sm:$0xff]
    %v195 = vld [vmem:[#allocation2 + $0x100] sm:$0xff]
    %v196 = vld [vmem:[#allocation2 + $0x108] sm:$0xff]
    %v197 = vld [vmem:[#allocation2 + $0x110] sm:$0xff]
    %v198 = vld [vmem:[#allocation2 + $0x118] sm:$0xff]
    %v199 = vld [vmem:[#allocation2 + $0x120] sm:$0xff]
    %v200 = vld [vmem:[#allocation2 + $0x128] sm:$0xff]
    %v201 = vld [vmem:[#allocation2 + $0x130] sm:$0xff]
    %v202 = vld [vmem:[#allocation2 + $0x138] sm:$0xff]
    %v203 = vld [vmem:[#allocation2 + $0x140] sm:$0xff]
    %v204 = vld [vmem:[#allocation2 + $0x148] sm:$0xff]
    %v205 = vld [vmem:[#allocation2 + $0x150] sm:$0xff]
    %v206 = vld [vmem:[#allocation2 + $0x158] sm:$0xff]
    %v207 = vld [vmem:[#allocation2 + $0x160] sm:$0xff]
    %v208 = vld [vmem:[#allocation2 + $0x168] sm:$0xff]
    %v209 = vld [vmem:[#allocation2 + $0x170] sm:$0xff]
    %v210 = vld [vmem:[#allocation2 + $0x178] sm:$0xff]
    %211 = vmatprep.subr.mxu0 0.0
    %212 = vmatpush1.msra.mxu0 %v178
    %213 = vmatprep.subr.mxu0 0.0
    %214 = vmatpush1.msra.mxu0 %v177
    %215 = vmatprep.subr.mxu0 0.0
    %216 = vmatpush1.msra.mxu0 %v176
    %217 = vmatprep.subr.mxu0 0.0
    %218 = vmatpush1.msra.mxu0 %v175
    %219 = vmatprep.subr.mxu0 0.0
    %220 = vmatpush1.msra.mxu0 %v174
    %221 = vmatprep.subr.mxu0 0.0
    %222 = vmatpush1.msra.mxu0 %v173
    %223 = vmatprep.subr.mxu0 0.0
    %224 = vmatpush1.msra.mxu0 %v172
    %225 = vmatprep.subr.mxu0 0.0
    %226 = vmatpush1.msra.mxu0 %v171
    %227 = vmatprep.subr.mxu0 0.0
    %228 = vmatpush1.msra.mxu0 %v170
    %229 = vmatprep.subr.mxu0 0.0
    %230 = vmatpush1.msra.mxu0 %v169
    %231 = vmatprep.subr.mxu0 0.0
    %232 = vmatpush1.msra.mxu0 %v168
    %233 = vmatprep.subr.mxu0 0.0
    %234 = vmatpush1.msra.mxu0 %v167
    %235 = vmatprep.subr.mxu0 0.0
    %236 = vmatpush1.msra.mxu0 %v166
    %237 = vmatprep.subr.mxu0 0.0
    %238 = vmatpush1.msra.mxu0 %v165
    %239 = vmatprep.subr.mxu0 0.0
    %240 = vmatpush1.msra.mxu0 %v164
    %241 = vmatprep.subr.mxu0 0.0
    %242 = vmatpush1.msra.mxu0 %v163
    %243 = vmatprep.subr.mxu0 0.0
    %244 = vmatpush2.msra.mxu0 %v194
    %245 = vmatprep.subr.mxu0 0.0
    %246 = vmatpush2.msra.mxu0 %v193
    %247 = vmatprep.subr.mxu0 0.0
    %248 = vmatpush2.msra.mxu0 %v192
    %249 = vmatprep.subr.mxu0 0.0
    %250 = vmatpush2.msra.mxu0 %v191
    %251 = vmatprep.subr.mxu0 0.0
    %252 = vmatpush2.msra.mxu0 %v190
    %253 = vmatprep.subr.mxu0 0.0
    %254 = vmatpush2.msra.mxu0 %v189
    %255 = vmatprep.subr.mxu0 0.0
    %256 = vmatpush2.msra.mxu0 %v188
    %257 = vmatprep.subr.mxu0 0.0
    %258 = vmatpush2.msra.mxu0 %v187
    %259 = vmatprep.subr.mxu0 0.0
    %260 = vmatpush2.msra.mxu0 %v186
    %261 = vmatprep.subr.mxu0 0.0
    %262 = vmatpush2.msra.mxu0 %v185
    %263 = vmatprep.subr.mxu0 0.0
    %264 = vmatpush2.msra.mxu0 %v184
    %265 = vmatprep.subr.mxu0 0.0
    %266 = vmatpush2.msra.mxu0 %v183
    %267 = vmatprep.subr.mxu0 0.0
    %268 = vmatpush2.msra.mxu0 %v182
    %269 = vmatprep.subr.mxu0 0.0
    %270 = vmatpush2.msra.mxu0 %v181
    %271 = vmatprep.subr.mxu0 0.0
    %272 = vmatpush2.msra.mxu0 %v180
    %273 = vmatprep.subr.mxu0 0.0
    %274 = vmatpush2.msra.mxu0 %v179
    %275 = vmatprep.mubr.f32.mxu0 %v140
    %276 = vmatmul.mubr.f32.gmra.mxu0 %v139
    %v277 = vpop.f32.mrf.mxu0
    %v278 = vadd.f32 0.0, %v277
    %v279 = vpop.f32.mrf.mxu0
    %280 = vmatprep.mubr.f32.mxu0 %v143
    %281 = vmatmul.mubr.f32.gmra.mxu0 %v142
    %v282 = vpop.f32.mrf.mxu0
    %v283 = vadd.f32 0.0, %v282
    %v284 = vpop.f32.mrf.mxu0
    %285 = vmatprep.mubr.f32.mxu0 %v146
    %286 = vmatmul.mubr.f32.gmra.mxu0 %v145
    %v287 = vpop.f32.mrf.mxu0
    %v288 = vadd.f32 0.0, %v287
    %v289 = vpop.f32.mrf.mxu0
    %290 = vmatprep.mubr.f32.mxu0 %v149
    %291 = vmatmul.mubr.f32.gmra.mxu0 %v148
    %v292 = vpop.f32.mrf.mxu0
    %v293 = vadd.f32 0.0, %v292
    %v294 = vpop.f32.mrf.mxu0
    %295 = vmatprep.mubr.f32.mxu0 %v152
    %296 = vmatmul.mubr.f32.gmra.mxu0 %v151
    %v297 = vpop.f32.mrf.mxu0
    %v298 = vadd.f32 0.0, %v297
    %v299 = vpop.f32.mrf.mxu0
    %300 = vmatprep.mubr.f32.mxu0 %v155
    %301 = vmatmul.mubr.f32.gmra.mxu0 %v154
    %v302 = vpop.f32.mrf.mxu0
    %v303 = vadd.f32 0.0, %v302
    %v304 = vpop.f32.mrf.mxu0
    %305 = vmatprep.mubr.f32.mxu0 %v158
    %306 = vmatmul.mubr.f32.gmra.mxu0 %v157
    %v307 = vpop.f32.mrf.mxu0
    %v308 = vadd.f32 0.0, %v307
    %v309 = vpop.f32.mrf.mxu0
    %310 = vmatprep.mubr.f32.mxu0 %v161
    %311 = vmatmul.mubr.f32.gmra.mxu0 %v160
    %v312 = vpop.f32.mrf.mxu0
    %v313 = vadd.f32 0.0, %v312
    %v314 = vpop.f32.mrf.mxu0
    %315 = vdwg.mxu0
    %316 = vmatprep.subr.mxu0 0.0
    %317 = vmatpush1.msra.mxu0 %v210
    %318 = vmatprep.subr.mxu0 0.0
    %319 = vmatpush1.msra.mxu0 %v209
    %320 = vmatprep.subr.mxu0 0.0
    %321 = vmatpush1.msra.mxu0 %v208
    %322 = vmatprep.subr.mxu0 0.0
    %323 = vmatpush1.msra.mxu0 %v207
    %324 = vmatprep.subr.mxu0 0.0
    %325 = vmatpush1.msra.mxu0 %v206
    %326 = vmatprep.subr.mxu0 0.0
    %327 = vmatpush1.msra.mxu0 %v205
    %328 = vmatprep.subr.mxu0 0.0
    %329 = vmatpush1.msra.mxu0 %v204
    %330 = vmatprep.subr.mxu0 0.0
    %331 = vmatpush1.msra.mxu0 %v203
    %332 = vmatprep.subr.mxu0 0.0
    %333 = vmatpush1.msra.mxu0 %v202
    %334 = vmatprep.subr.mxu0 0.0
    %335 = vmatpush1.msra.mxu0 %v201
    %336 = vmatprep.subr.mxu0 0.0
    %337 = vmatpush1.msra.mxu0 %v200
    %338 = vmatprep.subr.mxu0 0.0
    %339 = vmatpush1.msra.mxu0 %v199
    %340 = vmatprep.subr.mxu0 0.0
    %341 = vmatpush1.msra.mxu0 %v198
    %342 = vmatprep.subr.mxu0 0.0
    %343 = vmatpush1.msra.mxu0 %v197
    %344 = vmatprep.subr.mxu0 0.0
    %345 = vmatpush1.msra.mxu0 %v196
    %346 = vmatprep.subr.mxu0 0.0
    %347 = vmatpush1.msra.mxu0 %v195
    %348 = vmatprep.subr.mxu0 0.0
    %349 = vmatpush2.msra.mxu0 0.0
    %350 = vmatprep.subr.mxu0 0.0
    %351 = vmatpush2.msra.mxu0 0.0
    %352 = vmatprep.subr.mxu0 0.0
    %353 = vmatpush2.msra.mxu0 0.0
    %354 = vmatprep.subr.mxu0 0.0
    %355 = vmatpush2.msra.mxu0 0.0
    %356 = vmatprep.subr.mxu0 0.0
    %357 = vmatpush2.msra.mxu0 0.0
    %358 = vmatprep.subr.mxu0 0.0
    %359 = vmatpush2.msra.mxu0 0.0
    %360 = vmatprep.subr.mxu0 0.0
    %361 = vmatpush2.msra.mxu0 0.0
    %362 = vmatprep.subr.mxu0 0.0
    %363 = vmatpush2.msra.mxu0 0.0
    %364 = vmatprep.subr.mxu0 0.0
    %365 = vmatpush2.msra.mxu0 0.0
    %366 = vmatprep.subr.mxu0 0.0
    %367 = vmatpush2.msra.mxu0 0.0
    %368 = vmatprep.subr.mxu0 0.0
    %369 = vmatpush2.msra.mxu0 0.0
    %370 = vmatprep.subr.mxu0 0.0
    %371 = vmatpush2.msra.mxu0 0.0
    %372 = vmatprep.subr.mxu0 0.0
    %373 = vmatpush2.msra.mxu0 0.0
    %374 = vmatprep.subr.mxu0 0.0
    %375 = vmatpush2.msra.mxu0 0.0
    %376 = vmatprep.subr.mxu0 0.0
    %377 = vmatpush2.msra.mxu0 0.0
    %378 = vmatprep.subr.mxu0 0.0
    %379 = vmatpush2.msra.mxu0 0.0
    %380 = vmatprep.mubr.f32.mxu0 0.0
    %381 = vmatmul.mubr.f32.gmra.mxu0 %v141
    %v382 = vpop.f32.mrf.mxu0
    %v383 = vadd.f32 %v278, %v382
    %v384 = vpop.f32.mrf.mxu0
    %385 = vmatprep.mubr.f32.mxu0 0.0
    %386 = vmatmul.mubr.f32.gmra.mxu0 %v144
    %v387 = vpop.f32.mrf.mxu0
    %v388 = vadd.f32 %v283, %v387
    %v389 = vpop.f32.mrf.mxu0
    %390 = vmatprep.mubr.f32.mxu0 0.0
    %391 = vmatmul.mubr.f32.gmra.mxu0 %v147
    %v392 = vpop.f32.mrf.mxu0
    %v393 = vadd.f32 %v288, %v392
    %v394 = vpop.f32.mrf.mxu0
    %395 = vmatprep.mubr.f32.mxu0 0.0
    %396 = vmatmul.mubr.f32.gmra.mxu0 %v150
    %v397 = vpop.f32.mrf.mxu0
    %v398 = vadd.f32 %v293, %v397
    %v399 = vpop.f32.mrf.mxu0
    %400 = vmatprep.mubr.f32.mxu0 0.0
    %401 = vmatmul.mubr.f32.gmra.mxu0 %v153
    %v402 = vpop.f32.mrf.mxu0
    %v403 = vadd.f32 %v298, %v402
    %v404 = vpop.f32.mrf.mxu0
    %405 = vmatprep.mubr.f32.mxu0 0.0
    %406 = vmatmul.mubr.f32.gmra.mxu0 %v156
    %v407 = vpop.f32.mrf.mxu0
    %v408 = vadd.f32 %v303, %v407
    %v409 = vpop.f32.mrf.mxu0
    %410 = vmatprep.mubr.f32.mxu0 0.0
    %411 = vmatmul.mubr.f32.gmra.mxu0 %v159
    %v412 = vpop.f32.mrf.mxu0
    %v413 = vadd.f32 %v308, %v412
    %v414 = vpop.f32.mrf.mxu0
    %415 = vmatprep.mubr.f32.mxu0 0.0
    %416 = vmatmul.mubr.f32.gmra.mxu0 %v162
    %v417 = vpop.f32.mrf.mxu0
    %v418 = vadd.f32 %v313, %v417
    %v419 = vpop.f32.mrf.mxu0
    %420 = vdwg.mxu0
    %v421 = vld [vmem:[%s2] sm:$0xf]
    %v422 = vld [vmem:[%s2 + $0x4] sm:$0xf]
    %v423 = vld [vmem:[%s2 + $0x8] sm:$0xf]
    %v424 = vld [vmem:[%s2 + $0xc] sm:$0xf]
    %v425 = vld [vmem:[%s2 + $0x10] sm:$0xf]
    %v426 = vld [vmem:[%s2 + $0x14] sm:$0xf]
    %v427 = vld [vmem:[%s2 + $0x18] sm:$0xf]
    %v428 = vld [vmem:[%s2 + $0x1c] sm:$0xf]
    %v429 = vld [vmem:[%s3] sm:$0xff]
    %v430 = vld [vmem:[%s3 + $0x8] sm:$0xff]
    %v431 = vld [vmem:[%s3 + $0x10] sm:$0xff]
    %v432 = vld [vmem:[%s3 + $0x18] sm:$0xff]
    %v433 = vld [vmem:[%s3 + $0x20] sm:$0xff]
    %v434 = vld [vmem:[%s3 + $0x28] sm:$0xff]
    %v435 = vld [vmem:[%s3 + $0x30] sm:$0xff]
    %v436 = vld [vmem:[%s3 + $0x38] sm:$0xff]
    %v437 = vld [vmem:[%s6] sm:$0xf]
    %v438 = vld [vmem:[%s6 + $0x4] sm:$0xf]
    %v439 = vld [vmem:[%s6 + $0x8] sm:$0xf]
    %v440 = vld [vmem:[%s6 + $0xc] sm:$0xf]
    %v441 = vld [vmem:[%s4] sm:$0xff]
    %v442 = vld [vmem:[%s4 + $0x8] sm:$0xff]
    %v443 = vld [vmem:[%s4 + $0x10] sm:$0xff]
    %v444 = vld [vmem:[%s4 + $0x18] sm:$0xff]
    %v445 = vpack.c.bf16 %v388, %v383
    %v446 = vpack.c.bf16 %v398, %v393
    %v447 = vpack.c.bf16 %v408, %v403
    %v448 = vpack.c.bf16 %v418, %v413
    %v453 = vunpack.c.l.b16 %v441
    %v454 = vunpack.c.h.b16 %v441
    %v455 = vunpack.c.l.b16 %v442
    %v456 = vunpack.c.h.b16 %v442
    %v457 = vunpack.c.l.b16 %v443
    %v458 = vunpack.c.h.b16 %v443
    %v459 = vunpack.c.l.b16 %v444
    %v460 = vunpack.c.h.b16 %v444
    %v461 = vpack.c.b16 %v455, %v453
    %v462 = vpack.c.b16 %v456, %v454
    %v463 = vpack.c.b16 %v459, %v457
    %v464 = vpack.c.b16 %v460, %v458
    %vm469 = vcmask 261120
    %v471 = vsel %vm469, %v445, 0
    %v474 = vsel %vm469, %v446, 0
    %v477 = vsel %vm469, %v447, 0
    %v480 = vsel %vm469, %v448, 0
    %482 = vmatprep.subr.bf16.mxu0 0
    %483 = vmatpush1.bf16.msra.mxu0 0
    %484 = vmatprep.subr.bf16.mxu0 0
    %485 = vmatpush1.bf16.msra.mxu0 0
    %486 = vmatprep.subr.bf16.mxu0 0
    %487 = vmatpush1.bf16.msra.mxu0 0
    %488 = vmatprep.subr.bf16.mxu0 0
    %489 = vmatpush1.bf16.msra.mxu0 0
    %490 = vmatprep.subr.bf16.mxu0 0
    %491 = vmatpush1.bf16.msra.mxu0 0
    %492 = vmatprep.subr.bf16.mxu0 0
    %493 = vmatpush1.bf16.msra.mxu0 0
    %494 = vmatprep.subr.bf16.mxu0 %v464
    %495 = vmatpush1.bf16.msra.mxu0 %v463
    %496 = vmatprep.subr.bf16.mxu0 %v462
    %497 = vmatpush1.bf16.msra.mxu0 %v461
    %498 = vmatprep.subr.bf16.mxu0 0
    %499 = vmatpush2.bf16.msra.mxu0 0
    %500 = vmatprep.subr.bf16.mxu0 0
    %501 = vmatpush2.bf16.msra.mxu0 0
    %502 = vmatprep.subr.bf16.mxu0 0
    %503 = vmatpush2.bf16.msra.mxu0 0
    %504 = vmatprep.subr.bf16.mxu0 0
    %505 = vmatpush2.bf16.msra.mxu0 0
    %506 = vmatprep.subr.bf16.mxu0 0
    %507 = vmatpush2.bf16.msra.mxu0 0
    %508 = vmatprep.subr.bf16.mxu0 0
    %509 = vmatpush2.bf16.msra.mxu0 0
    %510 = vmatprep.subr.bf16.mxu0 0
    %511 = vmatpush2.bf16.msra.mxu0 0
    %512 = vmatprep.subr.bf16.mxu0 0
    %513 = vmatpush2.bf16.msra.mxu0 0
    %514 = vmatprep.mubr.bf16.mxu0 0
    %515 = vmatmul.mubr.bf16.gmra.mxu0 %v471
    %v516 = vpop.f32.mrf.mxu0
    %v517 = vadd.f32 0.0, %v516
    %v518 = vpop.f32.mrf.mxu0
    %v519 = vadd.f32 0.0, %v518
    %v520 = vpop.f32.mrf.mxu0
    %v521 = vadd.f32 0.0, %v520
    %v522 = vpop.f32.mrf.mxu0
    %v523 = vadd.f32 0.0, %v522
    %524 = vmatprep.mubr.bf16.mxu0 0
    %525 = vmatmul.mubr.bf16.gmra.mxu0 %v474
    %v526 = vpop.f32.mrf.mxu0
    %v527 = vadd.f32 0.0, %v526
    %v528 = vpop.f32.mrf.mxu0
    %v529 = vadd.f32 0.0, %v528
    %v530 = vpop.f32.mrf.mxu0
    %v531 = vadd.f32 0.0, %v530
    %v532 = vpop.f32.mrf.mxu0
    %v533 = vadd.f32 0.0, %v532
    %534 = vmatprep.mubr.bf16.mxu0 0
    %535 = vmatmul.mubr.bf16.gmra.mxu0 %v477
    %v536 = vpop.f32.mrf.mxu0
    %v537 = vadd.f32 0.0, %v536
    %v538 = vpop.f32.mrf.mxu0
    %v539 = vadd.f32 0.0, %v538
    %v540 = vpop.f32.mrf.mxu0
    %v541 = vadd.f32 0.0, %v540
    %v542 = vpop.f32.mrf.mxu0
    %v543 = vadd.f32 0.0, %v542
    %544 = vmatprep.mubr.bf16.mxu0 0
    %545 = vmatmul.mubr.bf16.gmra.mxu0 %v480
    %v546 = vpop.f32.mrf.mxu0
    %v547 = vadd.f32 0.0, %v546
    %v548 = vpop.f32.mrf.mxu0
    %v549 = vadd.f32 0.0, %v548
    %v550 = vpop.f32.mrf.mxu0
    %v551 = vadd.f32 0.0, %v550
    %v552 = vpop.f32.mrf.mxu0
    %v553 = vadd.f32 0.0, %v552
    %554 = vdwg.mxu0
    %v555 = vpack.c.bf16 %v523, %v519
    %v556 = vpack.c.bf16 %v533, %v529
    %v557 = vpack.c.bf16 %v543, %v539
    %v558 = vpack.c.bf16 %v553, %v549
    %v567 = vunpack.c.l.b16 %v421
    %v568 = vunpack.c.l.b16 %v422
    %v569 = vunpack.c.l.b16 %v423
    %v570 = vunpack.c.l.b16 %v424
    %v571 = vunpack.c.l.b16 %v425
    %v572 = vunpack.c.l.b16 %v426
    %v573 = vunpack.c.l.b16 %v427
    %v574 = vunpack.c.l.b16 %v428
    %v575 = vpack.c.b16 %v568, %v567
    %v576 = vpack.c.b16 %v570, %v569
    %v577 = vpack.c.b16 %v572, %v571
    %v578 = vpack.c.b16 %v574, %v573
    %vm579 = vcmask 523264
    %v581 = vsel %vm579, %v575, 0
    %v584 = vsel %vm579, %v576, 0
    %v587 = vsel %vm579, %v577, 0
    %v590 = vsel %vm579, %v578, 0
    %592 = vmatprep.subr.bf16.mxu0 0
    %593 = vmatpush1.bf16.msra.mxu0 0
    %594 = vmatprep.subr.bf16.mxu0 0
    %595 = vmatpush1.bf16.msra.mxu0 0
    %596 = vmatprep.subr.bf16.mxu0 0
    %597 = vmatpush1.bf16.msra.mxu0 0
    %598 = vmatprep.subr.bf16.mxu0 0
    %599 = vmatpush1.bf16.msra.mxu0 0
    %600 = vmatprep.subr.bf16.mxu0 0
    %601 = vmatpush1.bf16.msra.mxu0 %v558
    %602 = vmatprep.subr.bf16.mxu0 0
    %603 = vmatpush1.bf16.msra.mxu0 %v557
    %604 = vmatprep.subr.bf16.mxu0 0
    %605 = vmatpush1.bf16.msra.mxu0 %v556
    %606 = vmatprep.subr.bf16.mxu0 0
    %607 = vmatpush1.bf16.msra.mxu0 %v555
    %608 = vmatprep.subr.bf16.mxu0 0
    %609 = vmatpush2.bf16.msra.mxu0 0
    %610 = vmatprep.subr.bf16.mxu0 0
    %611 = vmatpush2.bf16.msra.mxu0 0
    %612 = vmatprep.subr.bf16.mxu0 0
    %613 = vmatpush2.bf16.msra.mxu0 0
    %614 = vmatprep.subr.bf16.mxu0 0
    %615 = vmatpush2.bf16.msra.mxu0 0
    %616 = vmatprep.subr.bf16.mxu0 0
    %617 = vmatpush2.bf16.msra.mxu0 0
    %618 = vmatprep.subr.bf16.mxu0 0
    %619 = vmatpush2.bf16.msra.mxu0 0
    %620 = vmatprep.subr.bf16.mxu0 0
    %621 = vmatpush2.bf16.msra.mxu0 0
    %622 = vmatprep.subr.bf16.mxu0 0
    %623 = vmatpush2.bf16.msra.mxu0 0
    %624 = vmatprep.mubr.bf16.mxu0 0
    %625 = vmatmul.mubr.bf16.gmra.mxu0 %v581
    %v626 = vpop.f32.mrf.mxu0
    %v627 = vadd.f32 0.0, %v626
    %v628 = vpop.f32.mrf.mxu0
    %v629 = vpop.f32.mrf.mxu0
    %v630 = vadd.f32 0.0, %v629
    %v631 = vpop.f32.mrf.mxu0
    %632 = vmatprep.mubr.bf16.mxu0 0
    %633 = vmatmul.mubr.bf16.gmra.mxu0 %v584
    %v634 = vpop.f32.mrf.mxu0
    %v635 = vadd.f32 0.0, %v634
    %v636 = vpop.f32.mrf.mxu0
    %v637 = vpop.f32.mrf.mxu0
    %v638 = vadd.f32 0.0, %v637
    %v639 = vpop.f32.mrf.mxu0
    %640 = vmatprep.mubr.bf16.mxu0 0
    %641 = vmatmul.mubr.bf16.gmra.mxu0 %v587
    %v642 = vpop.f32.mrf.mxu0
    %v643 = vadd.f32 0.0, %v642
    %v644 = vpop.f32.mrf.mxu0
    %v645 = vpop.f32.mrf.mxu0
    %v646 = vadd.f32 0.0, %v645
    %v647 = vpop.f32.mrf.mxu0
    %648 = vmatprep.mubr.bf16.mxu0 0
    %649 = vmatmul.mubr.bf16.gmra.mxu0 %v590
    %v650 = vpop.f32.mrf.mxu0
    %v651 = vadd.f32 0.0, %v650
    %v652 = vpop.f32.mrf.mxu0
    %v653 = vpop.f32.mrf.mxu0
    %v654 = vadd.f32 0.0, %v653
    %v655 = vpop.f32.mrf.mxu0
    %656 = vdwg.mxu0
    %658 = vset.pattern.permute.xlu0 0
    %659 = vperm.xlu0 %658, %v429
    %v660 = vpop.permute.xlu0 %659
    %663 = vset.pattern.permute.xlu0 0
    %664 = vperm.xlu0 %663, %v430
    %v665 = vpop.permute.xlu0 %664
    %668 = vset.pattern.permute.xlu0 0
    %669 = vperm.xlu0 %668, %v431
    %v670 = vpop.permute.xlu0 %669
    %673 = vset.pattern.permute.xlu0 0
    %674 = vperm.xlu0 %673, %v432
    %v675 = vpop.permute.xlu0 %674
    %678 = vset.pattern.permute.xlu0 0
    %679 = vperm.xlu0 %678, %v433
    %v680 = vpop.permute.xlu0 %679
    %683 = vset.pattern.permute.xlu0 0
    %684 = vperm.xlu0 %683, %v434
    %v685 = vpop.permute.xlu0 %684
    %688 = vset.pattern.permute.xlu0 0
    %689 = vperm.xlu0 %688, %v435
    %v690 = vpop.permute.xlu0 %689
    %693 = vset.pattern.permute.xlu0 0
    %694 = vperm.xlu0 %693, %v436
    %v695 = vpop.permute.xlu0 %694
    %v697 = vmul.f32 %v660, %v627
    %v698 = vmul.f32 %v665, %v630
    %v699 = vmul.f32 %v670, %v635
    %v700 = vmul.f32 %v675, %v638
    %v701 = vmul.f32 %v680, %v643
    %v702 = vmul.f32 %v685, %v646
    %v703 = vmul.f32 %v690, %v651
    %v704 = vmul.f32 %v695, %v654
    %v705 = vadd.f32 %v517, %v697
    %v706 = vadd.f32 %v521, %v698
    %v707 = vadd.f32 %v527, %v699
    %v708 = vadd.f32 %v531, %v700
    %v709 = vadd.f32 %v537, %v701
    %v710 = vadd.f32 %v541, %v702
    %v711 = vadd.f32 %v547, %v703
    %v712 = vadd.f32 %v551, %v704
    %v713 = vlaneseq
    %v714 = vshrl.u32 %v713, 7
    %v715 = vsub.s32 0, %v714
    %v716 = vrot.slane %v437, %v715
    %v717 = vadd.f32 %v705, %v716
    %v718 = vadd.f32 %v706, %v716
    %v719 = vadd.f32 %v707, %v716
    %v720 = vadd.f32 %v708, %v716
    %v721 = vadd.f32 %v709, %v716
    %v722 = vadd.f32 %v710, %v716
    %v723 = vadd.f32 %v711, %v716
    %v724 = vadd.f32 %v712, %v716
    %vm725 = vcmp.ge.f32.partialorder %v717, 0.0
    %vm726 = vcmp.ge.f32.partialorder %v718, 0.0
    %vm727 = vcmp.ge.f32.partialorder %v719, 0.0
    %vm728 = vcmp.ge.f32.partialorder %v720, 0.0
    %vm729 = vcmp.ge.f32.partialorder %v721, 0.0
    %vm730 = vcmp.ge.f32.partialorder %v722, 0.0
    %vm731 = vcmp.ge.f32.partialorder %v723, 0.0
    %vm732 = vcmp.ge.f32.partialorder %v724, 0.0
    %v733 = vlaneseq
    %v734 = vshrl.u32 %v733, 7
    %v735 = vsub.s32 1, %v734
    %v736 = vrot.slane %v437, %v735
    %v737 = vmul.f32 %v736, %v717
    %v738 = vmul.f32 %v736, %v718
    %v739 = vmul.f32 %v736, %v719
    %v740 = vmul.f32 %v736, %v720
    %v741 = vmul.f32 %v736, %v721
    %v742 = vmul.f32 %v736, %v722
    %v743 = vmul.f32 %v736, %v723
    %v744 = vmul.f32 %v736, %v724
    %v745 = vsel %vm725, %v717, %v737
    %v746 = vsel %vm726, %v718, %v738
    %v747 = vsel %vm727, %v719, %v739
    %v748 = vsel %vm728, %v720, %v740
    %v749 = vsel %vm729, %v721, %v741
    %v750 = vsel %vm730, %v722, %v742
    %v751 = vsel %vm731, %v723, %v743
    %v752 = vsel %vm732, %v724, %v744
    %v753 = vlaneseq
    %v754 = vshrl.u32 %v753, 7
    %v755 = vsub.s32 2, %v754
    %v756 = vrot.slane %v437, %v755
    %v757 = vmul.f32 %v756, %v745
    %v758 = vmul.f32 %v756, %v746
    %v759 = vmul.f32 %v756, %v747
    %v760 = vmul.f32 %v756, %v748
    %v761 = vmul.f32 %v756, %v749
    %v762 = vmul.f32 %v756, %v750
    %v763 = vmul.f32 %v756, %v751
    %v764 = vmul.f32 %v756, %v752
    %v765 = vlaneseq
    %v766 = vshrl.u32 %v765, 7
    %v767 = vsub.s32 3, %v766
    %v768 = vrot.slane %v437, %v767
    %v769 = vadd.f32 %v757, %v768
    %v770 = vadd.f32 %v758, %v768
    %v771 = vadd.f32 %v759, %v768
    %v772 = vadd.f32 %v760, %v768
    %v773 = vadd.f32 %v761, %v768
    %v774 = vadd.f32 %v762, %v768
    %v775 = vadd.f32 %v763, %v768
    %v776 = vadd.f32 %v764, %v768
    %v777 = vadd.f32 %v769, %v770
    %v778 = vadd.f32 %v777, %v771
    %v779 = vadd.f32 %v778, %v772
    %v780 = vadd.f32 %v779, %v773
    %v781 = vadd.f32 %v780, %v774
    %v782 = vadd.f32 %v781, %v775
    %v783 = vadd.f32 %v782, %v776
    %v784 = vrot.slane %v783, 4
    %v785 = vadd.f32 %v783, %v784
    %v786 = vrot.slane %v785, 2
    %v787 = vadd.f32 %v785, %v786
    %v788 = vrot.slane %v787, 1
    %v789 = vadd.f32 %v787, %v788
    %v790 = vmul.f32 %v789, 0.015625
    %v791 = vld [vmem:[#allocation4] sm:$0xff]
    %v792 = vld [vmem:[#allocation4 + $0x8] sm:$0xff]
    %v793 = vld [vmem:[#allocation4 + $0x10] sm:$0xff]
    %v794 = vld [vmem:[#allocation4 + $0x18] sm:$0xff]
    %v795 = vld [vmem:[#allocation4 + $0x20] sm:$0xff]
    %v796 = vld [vmem:[#allocation4 + $0x28] sm:$0xff]
    %v797 = vld [vmem:[#allocation4 + $0x30] sm:$0xff]
    %v798 = vld [vmem:[#allocation4 + $0x38] sm:$0xff]
    %v799 = vld [vmem:[#allocation4 + $0x40] sm:$0xff]
    %v800 = vld [vmem:[#allocation4 + $0x48] sm:$0xff]
    %v801 = vld [vmem:[#allocation4 + $0x50] sm:$0xff]
    %v802 = vld [vmem:[#allocation4 + $0x58] sm:$0xff]
    %v803 = vld [vmem:[#allocation4 + $0x60] sm:$0xff]
    %v804 = vld [vmem:[#allocation4 + $0x68] sm:$0xff]
    %v805 = vld [vmem:[#allocation4 + $0x70] sm:$0xff]
    %v806 = vld [vmem:[#allocation4 + $0x78] sm:$0xff]
    %v807 = vpack.c.bf16 %v770, %v769
    %v808 = vpack.c.bf16 %v772, %v771
    %v809 = vpack.c.bf16 %v774, %v773
    %v810 = vpack.c.bf16 %v776, %v775
    %v827 = vunpack.c.l.b16 %v791
    %v828 = vunpack.c.h.b16 %v791
    %v829 = vunpack.c.l.b16 %v792
    %v830 = vunpack.c.h.b16 %v792
    %v831 = vunpack.c.l.b16 %v793
    %v832 = vunpack.c.h.b16 %v793
    %v833 = vunpack.c.l.b16 %v794
    %v834 = vunpack.c.h.b16 %v794
    %v835 = vunpack.c.l.b16 %v795
    %v836 = vunpack.c.h.b16 %v795
    %v837 = vunpack.c.l.b16 %v796
    %v838 = vunpack.c.h.b16 %v796
    %v839 = vunpack.c.l.b16 %v797
    %v840 = vunpack.c.h.b16 %v797
    %v841 = vunpack.c.l.b16 %v798
    %v842 = vunpack.c.h.b16 %v798
    %v843 = vunpack.c.l.b16 %v799
    %v844 = vunpack.c.h.b16 %v799
    %v845 = vunpack.c.l.b16 %v800
    %v846 = vunpack.c.h.b16 %v800
    %v847 = vunpack.c.l.b16 %v801
    %v848 = vunpack.c.h.b16 %v801
    %v849 = vunpack.c.l.b16 %v802
    %v850 = vunpack.c.h.b16 %v802
    %v851 = vunpack.c.l.b16 %v803
    %v852 = vunpack.c.h.b16 %v803
    %v853 = vunpack.c.l.b16 %v804
    %v854 = vunpack.c.h.b16 %v804
    %v855 = vunpack.c.l.b16 %v805
    %v856 = vunpack.c.h.b16 %v805
    %v857 = vunpack.c.l.b16 %v806
    %v858 = vunpack.c.h.b16 %v806
    %v859 = vpack.c.b16 %v829, %v827
    %v860 = vpack.c.b16 %v830, %v828
    %v861 = vpack.c.b16 %v833, %v831
    %v862 = vpack.c.b16 %v834, %v832
    %v863 = vpack.c.b16 %v837, %v835
    %v864 = vpack.c.b16 %v838, %v836
    %v865 = vpack.c.b16 %v841, %v839
    %v866 = vpack.c.b16 %v842, %v840
    %v867 = vpack.c.b16 %v845, %v843
    %v868 = vpack.c.b16 %v846, %v844
    %v869 = vpack.c.b16 %v849, %v847
    %v870 = vpack.c.b16 %v850, %v848
    %v871 = vpack.c.b16 %v853, %v851
    %v872 = vpack.c.b16 %v854, %v852
    %v873 = vpack.c.b16 %v857, %v855
    %v874 = vpack.c.b16 %v858, %v856
    %891 = vmatprep.subr.bf16.mxu0 %v874
    %892 = vmatpush1.bf16.msra.mxu0 %v873
    %893 = vmatprep.subr.bf16.mxu0 %v872
    %894 = vmatpush1.bf16.msra.mxu0 %v871
    %895 = vmatprep.subr.bf16.mxu0 %v870
    %896 = vmatpush1.bf16.msra.mxu0 %v869
    %897 = vmatprep.subr.bf16.mxu0 %v868
    %898 = vmatpush1.bf16.msra.mxu0 %v867
    %899 = vmatprep.subr.bf16.mxu0 %v866
    %900 = vmatpush1.bf16.msra.mxu0 %v865
    %901 = vmatprep.subr.bf16.mxu0 %v864
    %902 = vmatpush1.bf16.msra.mxu0 %v863
    %903 = vmatprep.subr.bf16.mxu0 %v862
    %904 = vmatpush1.bf16.msra.mxu0 %v861
    %905 = vmatprep.subr.bf16.mxu0 %v860
    %906 = vmatpush1.bf16.msra.mxu0 %v859
    %907 = vmatprep.subr.bf16.mxu0 0
    %908 = vmatpush2.bf16.msra.mxu0 0
    %909 = vmatprep.subr.bf16.mxu0 0
    %910 = vmatpush2.bf16.msra.mxu0 0
    %911 = vmatprep.subr.bf16.mxu0 0
    %912 = vmatpush2.bf16.msra.mxu0 0
    %913 = vmatprep.subr.bf16.mxu0 0
    %914 = vmatpush2.bf16.msra.mxu0 0
    %915 = vmatprep.subr.bf16.mxu0 0
    %916 = vmatpush2.bf16.msra.mxu0 0
    %917 = vmatprep.subr.bf16.mxu0 0
    %918 = vmatpush2.bf16.msra.mxu0 0
    %919 = vmatprep.subr.bf16.mxu0 0
    %920 = vmatpush2.bf16.msra.mxu0 0
    %921 = vmatprep.subr.bf16.mxu0 0
    %922 = vmatpush2.bf16.msra.mxu0 0
    %923 = vmatprep.mubr.bf16.mxu0 0
    %924 = vmatmul.mubr.bf16.gmra.mxu0 %v807
    %v925 = vpop.f32.mrf.mxu0
    %v926 = vadd.f32 0.0, %v925
    %v927 = vpop.f32.mrf.mxu0
    %v928 = vadd.f32 0.0, %v927
    %v929 = vpop.f32.mrf.mxu0
    %v930 = vadd.f32 0.0, %v929
    %v931 = vpop.f32.mrf.mxu0
    %v932 = vadd.f32 0.0, %v931
    %933 = vmatprep.mubr.bf16.mxu0 0
    %934 = vmatmul.mubr.bf16.gmra.mxu0 %v808
    %v935 = vpop.f32.mrf.mxu0
    %v936 = vadd.f32 0.0, %v935
    %v937 = vpop.f32.mrf.mxu0
    %v938 = vadd.f32 0.0, %v937
    %v939 = vpop.f32.mrf.mxu0
    %v940 = vadd.f32 0.0, %v939
    %v941 = vpop.f32.mrf.mxu0
    %v942 = vadd.f32 0.0, %v941
    %943 = vmatprep.mubr.bf16.mxu0 0
    %944 = vmatmul.mubr.bf16.gmra.mxu0 %v809
    %v945 = vpop.f32.mrf.mxu0
    %v946 = vadd.f32 0.0, %v945
    %v947 = vpop.f32.mrf.mxu0
    %v948 = vadd.f32 0.0, %v947
    %v949 = vpop.f32.mrf.mxu0
    %v950 = vadd.f32 0.0, %v949
    %v951 = vpop.f32.mrf.mxu0
    %v952 = vadd.f32 0.0, %v951
    %953 = vmatprep.mubr.bf16.mxu0 0
    %954 = vmatmul.mubr.bf16.gmra.mxu0 %v810
    %v955 = vpop.f32.mrf.mxu0
    %v956 = vadd.f32 0.0, %v955
    %v957 = vpop.f32.mrf.mxu0
    %v958 = vadd.f32 0.0, %v957
    %v959 = vpop.f32.mrf.mxu0
    %v960 = vadd.f32 0.0, %v959
    %v961 = vpop.f32.mrf.mxu0
    %v962 = vadd.f32 0.0, %v961
    %963 = vdwg.mxu0
    %v964 = vpack.c.bf16 %v932, %v928
    %v965 = vpack.c.bf16 %v942, %v938
    %v966 = vpack.c.bf16 %v952, %v948
    %v967 = vpack.c.bf16 %v962, %v958
    %968 = vmatprep.subr.bf16.mxu0 0
    %969 = vmatpush1.bf16.msra.mxu0 0
    %970 = vmatprep.subr.bf16.mxu0 0
    %971 = vmatpush1.bf16.msra.mxu0 0
    %972 = vmatprep.subr.bf16.mxu0 0
    %973 = vmatpush1.bf16.msra.mxu0 0
    %974 = vmatprep.subr.bf16.mxu0 0
    %975 = vmatpush1.bf16.msra.mxu0 0
    %976 = vmatprep.subr.bf16.mxu0 0
    %977 = vmatpush1.bf16.msra.mxu0 %v967
    %978 = vmatprep.subr.bf16.mxu0 0
    %979 = vmatpush1.bf16.msra.mxu0 %v966
    %980 = vmatprep.subr.bf16.mxu0 0
    %981 = vmatpush1.bf16.msra.mxu0 %v965
    %982 = vmatprep.subr.bf16.mxu0 0
    %983 = vmatpush1.bf16.msra.mxu0 %v964
    %984 = vmatprep.subr.bf16.mxu0 0
    %985 = vmatpush2.bf16.msra.mxu0 0
    %986 = vmatprep.subr.bf16.mxu0 0
    %987 = vmatpush2.bf16.msra.mxu0 0
    %988 = vmatprep.subr.bf16.mxu0 0
    %989 = vmatpush2.bf16.msra.mxu0 0
    %990 = vmatprep.subr.bf16.mxu0 0
    %991 = vmatpush2.bf16.msra.mxu0 0
    %992 = vmatprep.subr.bf16.mxu0 0
    %993 = vmatpush2.bf16.msra.mxu0 0
    %994 = vmatprep.subr.bf16.mxu0 0
    %995 = vmatpush2.bf16.msra.mxu0 0
    %996 = vmatprep.subr.bf16.mxu0 0
    %997 = vmatpush2.bf16.msra.mxu0 0
    %998 = vmatprep.subr.bf16.mxu0 0
    %999 = vmatpush2.bf16.msra.mxu0 0
    %1000 = vmatprep.mubr.bf16.mxu0 0
    %1001 = vmatmul.mubr.bf16.gmra.mxu0 %v581
    %v1002 = vpop.f32.mrf.mxu0
    %v1003 = vadd.f32 0.0, %v1002
    %v1004 = vpop.f32.mrf.mxu0
    %v1005 = vpop.f32.mrf.mxu0
    %v1006 = vadd.f32 0.0, %v1005
    %v1007 = vpop.f32.mrf.mxu0
    %1008 = vmatprep.mubr.bf16.mxu0 0
    %1009 = vmatmul.mubr.bf16.gmra.mxu0 %v584
    %v1010 = vpop.f32.mrf.mxu0
    %v1011 = vadd.f32 0.0, %v1010
    %v1012 = vpop.f32.mrf.mxu0
    %v1013 = vpop.f32.mrf.mxu0
    %v1014 = vadd.f32 0.0, %v1013
    %v1015 = vpop.f32.mrf.mxu0
    %1016 = vmatprep.mubr.bf16.mxu0 0
    %1017 = vmatmul.mubr.bf16.gmra.mxu0 %v587
    %v1018 = vpop.f32.mrf.mxu0
    %v1019 = vadd.f32 0.0, %v1018
    %v1020 = vpop.f32.mrf.mxu0
    %v1021 = vpop.f32.mrf.mxu0
    %v1022 = vadd.f32 0.0, %v1021
    %v1023 = vpop.f32.mrf.mxu0
    %1024 = vmatprep.mubr.bf16.mxu0 0
    %1025 = vmatmul.mubr.bf16.gmra.mxu0 %v590
    %v1026 = vpop.f32.mrf.mxu0
    %v1027 = vadd.f32 0.0, %v1026
    %v1028 = vpop.f32.mrf.mxu0
    %v1029 = vpop.f32.mrf.mxu0
    %v1030 = vadd.f32 0.0, %v1029
    %v1031 = vpop.f32.mrf.mxu0
    %1032 = vdwg.mxu0
    %v1033 = vmul.f32 %v660, %v1003
    %v1034 = vmul.f32 %v665, %v1006
    %v1035 = vmul.f32 %v670, %v1011
    %v1036 = vmul.f32 %v675, %v1014
    %v1037 = vmul.f32 %v680, %v1019
    %v1038 = vmul.f32 %v685, %v1022
    %v1039 = vmul.f32 %v690, %v1027
    %v1040 = vmul.f32 %v695, %v1030
    %v1041 = vadd.f32 %v926, %v1033
    %v1042 = vadd.f32 %v930, %v1034
    %v1043 = vadd.f32 %v936, %v1035
    %v1044 = vadd.f32 %v940, %v1036
    %v1045 = vadd.f32 %v946, %v1037
    %v1046 = vadd.f32 %v950, %v1038
    %v1047 = vadd.f32 %v956, %v1039
    %v1048 = vadd.f32 %v960, %v1040
    %v1049 = vlaneseq
    %v1050 = vshrl.u32 %v1049, 7
    %v1051 = vsub.s32 0, %v1050
    %v1052 = vrot.slane %v438, %v1051
    %v1053 = vadd.f32 %v1041, %v1052
    %v1054 = vadd.f32 %v1042, %v1052
    %v1055 = vadd.f32 %v1043, %v1052
    %v1056 = vadd.f32 %v1044, %v1052
    %v1057 = vadd.f32 %v1045, %v1052
    %v1058 = vadd.f32 %v1046, %v1052
    %v1059 = vadd.f32 %v1047, %v1052
    %v1060 = vadd.f32 %v1048, %v1052
    %vm1061 = vcmp.ge.f32.partialorder %v1053, 0.0
    %vm1062 = vcmp.ge.f32.partialorder %v1054, 0.0
    %vm1063 = vcmp.ge.f32.partialorder %v1055, 0.0
    %vm1064 = vcmp.ge.f32.partialorder %v1056, 0.0
    %vm1065 = vcmp.ge.f32.partialorder %v1057, 0.0
    %vm1066 = vcmp.ge.f32.partialorder %v1058, 0.0
    %vm1067 = vcmp.ge.f32.partialorder %v1059, 0.0
    %vm1068 = vcmp.ge.f32.partialorder %v1060, 0.0
    %v1069 = vlaneseq
    %v1070 = vshrl.u32 %v1069, 7
    %v1071 = vsub.s32 1, %v1070
    %v1072 = vrot.slane %v438, %v1071
    %v1073 = vmul.f32 %v1072, %v1053
    %v1074 = vmul.f32 %v1072, %v1054
    %v1075 = vmul.f32 %v1072, %v1055
    %v1076 = vmul.f32 %v1072, %v1056
    %v1077 = vmul.f32 %v1072, %v1057
    %v1078 = vmul.f32 %v1072, %v1058
    %v1079 = vmul.f32 %v1072, %v1059
    %v1080 = vmul.f32 %v1072, %v1060
    %v1081 = vsel %vm1061, %v1053, %v1073
    %v1082 = vsel %vm1062, %v1054, %v1074
    %v1083 = vsel %vm1063, %v1055, %v1075
    %v1084 = vsel %vm1064, %v1056, %v1076
    %v1085 = vsel %vm1065, %v1057, %v1077
    %v1086 = vsel %vm1066, %v1058, %v1078
    %v1087 = vsel %vm1067, %v1059, %v1079
    %v1088 = vsel %vm1068, %v1060, %v1080
    %v1089 = vlaneseq
    %v1090 = vshrl.u32 %v1089, 7
    %v1091 = vsub.s32 2, %v1090
    %v1092 = vrot.slane %v438, %v1091
    %v1093 = vmul.f32 %v1092, %v1081
    %v1094 = vmul.f32 %v1092, %v1082
    %v1095 = vmul.f32 %v1092, %v1083
    %v1096 = vmul.f32 %v1092, %v1084
    %v1097 = vmul.f32 %v1092, %v1085
    %v1098 = vmul.f32 %v1092, %v1086
    %v1099 = vmul.f32 %v1092, %v1087
    %v1100 = vmul.f32 %v1092, %v1088
    %v1101 = vlaneseq
    %v1102 = vshrl.u32 %v1101, 7
    %v1103 = vsub.s32 3, %v1102
    %v1104 = vrot.slane %v438, %v1103
    %v1105 = vadd.f32 %v1093, %v1104
    %v1106 = vadd.f32 %v1094, %v1104
    %v1107 = vadd.f32 %v1095, %v1104
    %v1108 = vadd.f32 %v1096, %v1104
    %v1109 = vadd.f32 %v1097, %v1104
    %v1110 = vadd.f32 %v1098, %v1104
    %v1111 = vadd.f32 %v1099, %v1104
    %v1112 = vadd.f32 %v1100, %v1104
    %v1113 = vadd.f32 %v1105, %v1106
    %v1114 = vadd.f32 %v1113, %v1107
    %v1115 = vadd.f32 %v1114, %v1108
    %v1116 = vadd.f32 %v1115, %v1109
    %v1117 = vadd.f32 %v1116, %v1110
    %v1118 = vadd.f32 %v1117, %v1111
    %v1119 = vadd.f32 %v1118, %v1112
    %v1120 = vrot.slane %v1119, 4
    %v1121 = vadd.f32 %v1119, %v1120
    %v1122 = vrot.slane %v1121, 2
    %v1123 = vadd.f32 %v1121, %v1122
    %v1124 = vrot.slane %v1123, 1
    %v1125 = vadd.f32 %v1123, %v1124
    %v1126 = vmul.f32 %v1125, 0.015625
    %s1127 = scalar_lea.vmem [#allocation4], 128
    %v1128 = vld [vmem:[%s1127] sm:$0xff]
    %v1129 = vld [vmem:[%s1127 + $0x8] sm:$0xff]
    %v1130 = vld [vmem:[%s1127 + $0x10] sm:$0xff]
    %v1131 = vld [vmem:[%s1127 + $0x18] sm:$0xff]
    %v1132 = vld [vmem:[%s1127 + $0x20] sm:$0xff]
    %v1133 = vld [vmem:[%s1127 + $0x28] sm:$0xff]
    %v1134 = vld [vmem:[%s1127 + $0x30] sm:$0xff]
    %v1135 = vld [vmem:[%s1127 + $0x38] sm:$0xff]
    %v1136 = vld [vmem:[%s1127 + $0x40] sm:$0xff]
    %v1137 = vld [vmem:[%s1127 + $0x48] sm:$0xff]
    %v1138 = vld [vmem:[%s1127 + $0x50] sm:$0xff]
    %v1139 = vld [vmem:[%s1127 + $0x58] sm:$0xff]
    %v1140 = vld [vmem:[%s1127 + $0x60] sm:$0xff]
    %v1141 = vld [vmem:[%s1127 + $0x68] sm:$0xff]
    %v1142 = vld [vmem:[%s1127 + $0x70] sm:$0xff]
    %v1143 = vld [vmem:[%s1127 + $0x78] sm:$0xff]
    %v1144 = vpack.c.bf16 %v1106, %v1105
    %v1145 = vpack.c.bf16 %v1108, %v1107
    %v1146 = vpack.c.bf16 %v1110, %v1109
    %v1147 = vpack.c.bf16 %v1112, %v1111
    %v1164 = vunpack.c.l.b16 %v1128
    %v1165 = vunpack.c.h.b16 %v1128
    %v1166 = vunpack.c.l.b16 %v1129
    %v1167 = vunpack.c.h.b16 %v1129
    %v1168 = vunpack.c.l.b16 %v1130
    %v1169 = vunpack.c.h.b16 %v1130
    %v1170 = vunpack.c.l.b16 %v1131
    %v1171 = vunpack.c.h.b16 %v1131
    %v1172 = vunpack.c.l.b16 %v1132
    %v1173 = vunpack.c.h.b16 %v1132
    %v1174 = vunpack.c.l.b16 %v1133
    %v1175 = vunpack.c.h.b16 %v1133
    %v1176 = vunpack.c.l.b16 %v1134
    %v1177 = vunpack.c.h.b16 %v1134
    %v1178 = vunpack.c.l.b16 %v1135
    %v1179 = vunpack.c.h.b16 %v1135
    %v1180 = vunpack.c.l.b16 %v1136
    %v1181 = vunpack.c.h.b16 %v1136
    %v1182 = vunpack.c.l.b16 %v1137
    %v1183 = vunpack.c.h.b16 %v1137
    %v1184 = vunpack.c.l.b16 %v1138
    %v1185 = vunpack.c.h.b16 %v1138
    %v1186 = vunpack.c.l.b16 %v1139
    %v1187 = vunpack.c.h.b16 %v1139
    %v1188 = vunpack.c.l.b16 %v1140
    %v1189 = vunpack.c.h.b16 %v1140
    %v1190 = vunpack.c.l.b16 %v1141
    %v1191 = vunpack.c.h.b16 %v1141
    %v1192 = vunpack.c.l.b16 %v1142
    %v1193 = vunpack.c.h.b16 %v1142
    %v1194 = vunpack.c.l.b16 %v1143
    %v1195 = vunpack.c.h.b16 %v1143
    %v1196 = vpack.c.b16 %v1166, %v1164
    %v1197 = vpack.c.b16 %v1167, %v1165
    %v1198 = vpack.c.b16 %v1170, %v1168
    %v1199 = vpack.c.b16 %v1171, %v1169
    %v1200 = vpack.c.b16 %v1174, %v1172
    %v1201 = vpack.c.b16 %v1175, %v1173
    %v1202 = vpack.c.b16 %v1178, %v1176
    %v1203 = vpack.c.b16 %v1179, %v1177
    %v1204 = vpack.c.b16 %v1182, %v1180
    %v1205 = vpack.c.b16 %v1183, %v1181
    %v1206 = vpack.c.b16 %v1186, %v1184
    %v1207 = vpack.c.b16 %v1187, %v1185
    %v1208 = vpack.c.b16 %v1190, %v1188
    %v1209 = vpack.c.b16 %v1191, %v1189
    %v1210 = vpack.c.b16 %v1194, %v1192
    %v1211 = vpack.c.b16 %v1195, %v1193
    %1228 = vmatprep.subr.bf16.mxu0 %v1211
    %1229 = vmatpush1.bf16.msra.mxu0 %v1210
    %1230 = vmatprep.subr.bf16.mxu0 %v1209
    %1231 = vmatpush1.bf16.msra.mxu0 %v1208
    %1232 = vmatprep.subr.bf16.mxu0 %v1207
    %1233 = vmatpush1.bf16.msra.mxu0 %v1206
    %1234 = vmatprep.subr.bf16.mxu0 %v1205
    %1235 = vmatpush1.bf16.msra.mxu0 %v1204
    %1236 = vmatprep.subr.bf16.mxu0 %v1203
    %1237 = vmatpush1.bf16.msra.mxu0 %v1202
    %1238 = vmatprep.subr.bf16.mxu0 %v1201
    %1239 = vmatpush1.bf16.msra.mxu0 %v1200
    %1240 = vmatprep.subr.bf16.mxu0 %v1199
    %1241 = vmatpush1.bf16.msra.mxu0 %v1198
    %1242 = vmatprep.subr.bf16.mxu0 %v1197
    %1243 = vmatpush1.bf16.msra.mxu0 %v1196
    %1244 = vmatprep.subr.bf16.mxu0 0
    %1245 = vmatpush2.bf16.msra.mxu0 0
    %1246 = vmatprep.subr.bf16.mxu0 0
    %1247 = vmatpush2.bf16.msra.mxu0 0
    %1248 = vmatprep.subr.bf16.mxu0 0
    %1249 = vmatpush2.bf16.msra.mxu0 0
    %1250 = vmatprep.subr.bf16.mxu0 0
    %1251 = vmatpush2.bf16.msra.mxu0 0
    %1252 = vmatprep.subr.bf16.mxu0 0
    %1253 = vmatpush2.bf16.msra.mxu0 0
    %1254 = vmatprep.subr.bf16.mxu0 0
    %1255 = vmatpush2.bf16.msra.mxu0 0
    %1256 = vmatprep.subr.bf16.mxu0 0
    %1257 = vmatpush2.bf16.msra.mxu0 0
    %1258 = vmatprep.subr.bf16.mxu0 0
    %1259 = vmatpush2.bf16.msra.mxu0 0
    %1260 = vmatprep.mubr.bf16.mxu0 0
    %1261 = vmatmul.mubr.bf16.gmra.mxu0 %v1144
    %v1262 = vpop.f32.mrf.mxu0
    %v1263 = vadd.f32 0.0, %v1262
    %v1264 = vpop.f32.mrf.mxu0
    %v1265 = vadd.f32 0.0, %v1264
    %v1266 = vpop.f32.mrf.mxu0
    %v1267 = vadd.f32 0.0, %v1266
    %v1268 = vpop.f32.mrf.mxu0
    %v1269 = vadd.f32 0.0, %v1268
    %1270 = vmatprep.mubr.bf16.mxu0 0
    %1271 = vmatmul.mubr.bf16.gmra.mxu0 %v1145
    %v1272 = vpop.f32.mrf.mxu0
    %v1273 = vadd.f32 0.0, %v1272
    %v1274 = vpop.f32.mrf.mxu0
    %v1275 = vadd.f32 0.0, %v1274
    %v1276 = vpop.f32.mrf.mxu0
    %v1277 = vadd.f32 0.0, %v1276
    %v1278 = vpop.f32.mrf.mxu0
    %v1279 = vadd.f32 0.0, %v1278
    %1280 = vmatprep.mubr.bf16.mxu0 0
    %1281 = vmatmul.mubr.bf16.gmra.mxu0 %v1146
    %v1282 = vpop.f32.mrf.mxu0
    %v1283 = vadd.f32 0.0, %v1282
    %v1284 = vpop.f32.mrf.mxu0
    %v1285 = vadd.f32 0.0, %v1284
    %v1286 = vpop.f32.mrf.mxu0
    %v1287 = vadd.f32 0.0, %v1286
    %v1288 = vpop.f32.mrf.mxu0
    %v1289 = vadd.f32 0.0, %v1288
    %1290 = vmatprep.mubr.bf16.mxu0 0
    %1291 = vmatmul.mubr.bf16.gmra.mxu0 %v1147
    %v1292 = vpop.f32.mrf.mxu0
    %v1293 = vadd.f32 0.0, %v1292
    %v1294 = vpop.f32.mrf.mxu0
    %v1295 = vadd.f32 0.0, %v1294
    %v1296 = vpop.f32.mrf.mxu0
    %v1297 = vadd.f32 0.0, %v1296
    %v1298 = vpop.f32.mrf.mxu0
    %v1299 = vadd.f32 0.0, %v1298
    %1300 = vdwg.mxu0
    %v1301 = vpack.c.bf16 %v1269, %v1265
    %v1302 = vpack.c.bf16 %v1279, %v1275
    %v1303 = vpack.c.bf16 %v1289, %v1285
    %v1304 = vpack.c.bf16 %v1299, %v1295
    %1305 = vmatprep.subr.bf16.mxu0 0
    %1306 = vmatpush1.bf16.msra.mxu0 0
    %1307 = vmatprep.subr.bf16.mxu0 0
    %1308 = vmatpush1.bf16.msra.mxu0 0
    %1309 = vmatprep.subr.bf16.mxu0 0
    %1310 = vmatpush1.bf16.msra.mxu0 0
    %1311 = vmatprep.subr.bf16.mxu0 0
    %1312 = vmatpush1.bf16.msra.mxu0 0
    %1313 = vmatprep.subr.bf16.mxu0 0
    %1314 = vmatpush1.bf16.msra.mxu0 %v1304
    %1315 = vmatprep.subr.bf16.mxu0 0
    %1316 = vmatpush1.bf16.msra.mxu0 %v1303
    %1317 = vmatprep.subr.bf16.mxu0 0
    %1318 = vmatpush1.bf16.msra.mxu0 %v1302
    %1319 = vmatprep.subr.bf16.mxu0 0
    %1320 = vmatpush1.bf16.msra.mxu0 %v1301
    %1321 = vmatprep.subr.bf16.mxu0 0
    %1322 = vmatpush2.bf16.msra.mxu0 0
    %1323 = vmatprep.subr.bf16.mxu0 0
    %1324 = vmatpush2.bf16.msra.mxu0 0
    %1325 = vmatprep.subr.bf16.mxu0 0
    %1326 = vmatpush2.bf16.msra.mxu0 0
    %1327 = vmatprep.subr.bf16.mxu0 0
    %1328 = vmatpush2.bf16.msra.mxu0 0
    %1329 = vmatprep.subr.bf16.mxu0 0
    %1330 = vmatpush2.bf16.msra.mxu0 0
    %1331 = vmatprep.subr.bf16.mxu0 0
    %1332 = vmatpush2.bf16.msra.mxu0 0
    %1333 = vmatprep.subr.bf16.mxu0 0
    %1334 = vmatpush2.bf16.msra.mxu0 0
    %1335 = vmatprep.subr.bf16.mxu0 0
    %1336 = vmatpush2.bf16.msra.mxu0 0
    %1337 = vmatprep.mubr.bf16.mxu0 0
    %1338 = vmatmul.mubr.bf16.gmra.mxu0 %v581
    %v1339 = vpop.f32.mrf.mxu0
    %v1340 = vadd.f32 0.0, %v1339
    %v1341 = vpop.f32.mrf.mxu0
    %v1342 = vpop.f32.mrf.mxu0
    %v1343 = vadd.f32 0.0, %v1342
    %v1344 = vpop.f32.mrf.mxu0
    %1345 = vmatprep.mubr.bf16.mxu0 0
    %1346 = vmatmul.mubr.bf16.gmra.mxu0 %v584
    %v1347 = vpop.f32.mrf.mxu0
    %v1348 = vadd.f32 0.0, %v1347
    %v1349 = vpop.f32.mrf.mxu0
    %v1350 = vpop.f32.mrf.mxu0
    %v1351 = vadd.f32 0.0, %v1350
    %v1352 = vpop.f32.mrf.mxu0
    %1353 = vmatprep.mubr.bf16.mxu0 0
    %1354 = vmatmul.mubr.bf16.gmra.mxu0 %v587
    %v1355 = vpop.f32.mrf.mxu0
    %v1356 = vadd.f32 0.0, %v1355
    %v1357 = vpop.f32.mrf.mxu0
    %v1358 = vpop.f32.mrf.mxu0
    %v1359 = vadd.f32 0.0, %v1358
    %v1360 = vpop.f32.mrf.mxu0
    %1361 = vmatprep.mubr.bf16.mxu0 0
    %1362 = vmatmul.mubr.bf16.gmra.mxu0 %v590
    %v1363 = vpop.f32.mrf.mxu0
    %v1364 = vadd.f32 0.0, %v1363
    %v1365 = vpop.f32.mrf.mxu0
    %v1366 = vpop.f32.mrf.mxu0
    %v1367 = vadd.f32 0.0, %v1366
    %v1368 = vpop.f32.mrf.mxu0
    %1369 = vdwg.mxu0
    %v1370 = vmul.f32 %v660, %v1340
    %v1371 = vmul.f32 %v665, %v1343
    %v1372 = vmul.f32 %v670, %v1348
    %v1373 = vmul.f32 %v675, %v1351
    %v1374 = vmul.f32 %v680, %v1356
    %v1375 = vmul.f32 %v685, %v1359
    %v1376 = vmul.f32 %v690, %v1364
    %v1377 = vmul.f32 %v695, %v1367
    %v1378 = vadd.f32 %v1263, %v1370
    %v1379 = vadd.f32 %v1267, %v1371
    %v1380 = vadd.f32 %v1273, %v1372
    %v1381 = vadd.f32 %v1277, %v1373
    %v1382 = vadd.f32 %v1283, %v1374
    %v1383 = vadd.f32 %v1287, %v1375
    %v1384 = vadd.f32 %v1293, %v1376
    %v1385 = vadd.f32 %v1297, %v1377
    %v1386 = vlaneseq
    %v1387 = vshrl.u32 %v1386, 7
    %v1388 = vsub.s32 0, %v1387
    %v1389 = vrot.slane %v439, %v1388
    %v1390 = vadd.f32 %v1378, %v1389
    %v1391 = vadd.f32 %v1379, %v1389
    %v1392 = vadd.f32 %v1380, %v1389
    %v1393 = vadd.f32 %v1381, %v1389
    %v1394 = vadd.f32 %v1382, %v1389
    %v1395 = vadd.f32 %v1383, %v1389
    %v1396 = vadd.f32 %v1384, %v1389
    %v1397 = vadd.f32 %v1385, %v1389
    %vm1398 = vcmp.ge.f32.partialorder %v1390, 0.0
    %vm1399 = vcmp.ge.f32.partialorder %v1391, 0.0
    %vm1400 = vcmp.ge.f32.partialorder %v1392, 0.0
    %vm1401 = vcmp.ge.f32.partialorder %v1393, 0.0
    %vm1402 = vcmp.ge.f32.partialorder %v1394, 0.0
    %vm1403 = vcmp.ge.f32.partialorder %v1395, 0.0
    %vm1404 = vcmp.ge.f32.partialorder %v1396, 0.0
    %vm1405 = vcmp.ge.f32.partialorder %v1397, 0.0
    %v1406 = vlaneseq
    %v1407 = vshrl.u32 %v1406, 7
    %v1408 = vsub.s32 1, %v1407
    %v1409 = vrot.slane %v439, %v1408
    %v1410 = vmul.f32 %v1409, %v1390
    %v1411 = vmul.f32 %v1409, %v1391
    %v1412 = vmul.f32 %v1409, %v1392
    %v1413 = vmul.f32 %v1409, %v1393
    %v1414 = vmul.f32 %v1409, %v1394
    %v1415 = vmul.f32 %v1409, %v1395
    %v1416 = vmul.f32 %v1409, %v1396
    %v1417 = vmul.f32 %v1409, %v1397
    %v1418 = vsel %vm1398, %v1390, %v1410
    %v1419 = vsel %vm1399, %v1391, %v1411
    %v1420 = vsel %vm1400, %v1392, %v1412
    %v1421 = vsel %vm1401, %v1393, %v1413
    %v1422 = vsel %vm1402, %v1394, %v1414
    %v1423 = vsel %vm1403, %v1395, %v1415
    %v1424 = vsel %vm1404, %v1396, %v1416
    %v1425 = vsel %vm1405, %v1397, %v1417
    %v1426 = vlaneseq
    %v1427 = vshrl.u32 %v1426, 7
    %v1428 = vsub.s32 2, %v1427
    %v1429 = vrot.slane %v439, %v1428
    %v1430 = vmul.f32 %v1429, %v1418
    %v1431 = vmul.f32 %v1429, %v1419
    %v1432 = vmul.f32 %v1429, %v1420
    %v1433 = vmul.f32 %v1429, %v1421
    %v1434 = vmul.f32 %v1429, %v1422
    %v1435 = vmul.f32 %v1429, %v1423
    %v1436 = vmul.f32 %v1429, %v1424
    %v1437 = vmul.f32 %v1429, %v1425
    %v1438 = vlaneseq
    %v1439 = vshrl.u32 %v1438, 7
    %v1440 = vsub.s32 3, %v1439
    %v1441 = vrot.slane %v439, %v1440
    %v1442 = vadd.f32 %v1430, %v1441
    %v1443 = vadd.f32 %v1431, %v1441
    %v1444 = vadd.f32 %v1432, %v1441
    %v1445 = vadd.f32 %v1433, %v1441
    %v1446 = vadd.f32 %v1434, %v1441
    %v1447 = vadd.f32 %v1435, %v1441
    %v1448 = vadd.f32 %v1436, %v1441
    %v1449 = vadd.f32 %v1437, %v1441
    %v1450 = vadd.f32 %v1442, %v1443
    %v1451 = vadd.f32 %v1450, %v1444
    %v1452 = vadd.f32 %v1451, %v1445
    %v1453 = vadd.f32 %v1452, %v1446
    %v1454 = vadd.f32 %v1453, %v1447
    %v1455 = vadd.f32 %v1454, %v1448
    %v1456 = vadd.f32 %v1455, %v1449
    %v1457 = vrot.slane %v1456, 4
    %v1458 = vadd.f32 %v1456, %v1457
    %v1459 = vrot.slane %v1458, 2
    %v1460 = vadd.f32 %v1458, %v1459
    %v1461 = vrot.slane %v1460, 1
    %v1462 = vadd.f32 %v1460, %v1461
    %v1463 = vmul.f32 %v1462, 0.015625
    %s1464 = scalar_lea.vmem [#allocation4], 256
    %v1465 = vld [vmem:[%s1464] sm:$0xff]
    %v1466 = vld [vmem:[%s1464 + $0x8] sm:$0xff]
    %v1467 = vld [vmem:[%s1464 + $0x10] sm:$0xff]
    %v1468 = vld [vmem:[%s1464 + $0x18] sm:$0xff]
    %v1469 = vld [vmem:[%s1464 + $0x20] sm:$0xff]
    %v1470 = vld [vmem:[%s1464 + $0x28] sm:$0xff]
    %v1471 = vld [vmem:[%s1464 + $0x30] sm:$0xff]
    %v1472 = vld [vmem:[%s1464 + $0x38] sm:$0xff]
    %v1473 = vld [vmem:[%s1464 + $0x40] sm:$0xff]
    %v1474 = vld [vmem:[%s1464 + $0x48] sm:$0xff]
    %v1475 = vld [vmem:[%s1464 + $0x50] sm:$0xff]
    %v1476 = vld [vmem:[%s1464 + $0x58] sm:$0xff]
    %v1477 = vld [vmem:[%s1464 + $0x60] sm:$0xff]
    %v1478 = vld [vmem:[%s1464 + $0x68] sm:$0xff]
    %v1479 = vld [vmem:[%s1464 + $0x70] sm:$0xff]
    %v1480 = vld [vmem:[%s1464 + $0x78] sm:$0xff]
    %v1481 = vpack.c.bf16 %v1443, %v1442
    %v1482 = vpack.c.bf16 %v1445, %v1444
    %v1483 = vpack.c.bf16 %v1447, %v1446
    %v1484 = vpack.c.bf16 %v1449, %v1448
    %v1501 = vunpack.c.l.b16 %v1465
    %v1502 = vunpack.c.h.b16 %v1465
    %v1503 = vunpack.c.l.b16 %v1466
    %v1504 = vunpack.c.h.b16 %v1466
    %v1505 = vunpack.c.l.b16 %v1467
    %v1506 = vunpack.c.h.b16 %v1467
    %v1507 = vunpack.c.l.b16 %v1468
    %v1508 = vunpack.c.h.b16 %v1468
    %v1509 = vunpack.c.l.b16 %v1469
    %v1510 = vunpack.c.h.b16 %v1469
    %v1511 = vunpack.c.l.b16 %v1470
    %v1512 = vunpack.c.h.b16 %v1470
    %v1513 = vunpack.c.l.b16 %v1471
    %v1514 = vunpack.c.h.b16 %v1471
    %v1515 = vunpack.c.l.b16 %v1472
    %v1516 = vunpack.c.h.b16 %v1472
    %v1517 = vunpack.c.l.b16 %v1473
    %v1518 = vunpack.c.h.b16 %v1473
    %v1519 = vunpack.c.l.b16 %v1474
    %v1520 = vunpack.c.h.b16 %v1474
    %v1521 = vunpack.c.l.b16 %v1475
    %v1522 = vunpack.c.h.b16 %v1475
    %v1523 = vunpack.c.l.b16 %v1476
    %v1524 = vunpack.c.h.b16 %v1476
    %v1525 = vunpack.c.l.b16 %v1477
    %v1526 = vunpack.c.h.b16 %v1477
    %v1527 = vunpack.c.l.b16 %v1478
    %v1528 = vunpack.c.h.b16 %v1478
    %v1529 = vunpack.c.l.b16 %v1479
    %v1530 = vunpack.c.h.b16 %v1479
    %v1531 = vunpack.c.l.b16 %v1480
    %v1532 = vunpack.c.h.b16 %v1480
    %v1533 = vpack.c.b16 %v1503, %v1501
    %v1534 = vpack.c.b16 %v1504, %v1502
    %v1535 = vpack.c.b16 %v1507, %v1505
    %v1536 = vpack.c.b16 %v1508, %v1506
    %v1537 = vpack.c.b16 %v1511, %v1509
    %v1538 = vpack.c.b16 %v1512, %v1510
    %v1539 = vpack.c.b16 %v1515, %v1513
    %v1540 = vpack.c.b16 %v1516, %v1514
    %v1541 = vpack.c.b16 %v1519, %v1517
    %v1542 = vpack.c.b16 %v1520, %v1518
    %v1543 = vpack.c.b16 %v1523, %v1521
    %v1544 = vpack.c.b16 %v1524, %v1522
    %v1545 = vpack.c.b16 %v1527, %v1525
    %v1546 = vpack.c.b16 %v1528, %v1526
    %v1547 = vpack.c.b16 %v1531, %v1529
    %v1548 = vpack.c.b16 %v1532, %v1530
    %1565 = vmatprep.subr.bf16.mxu0 %v1548
    %1566 = vmatpush1.bf16.msra.mxu0 %v1547
    %1567 = vmatprep.subr.bf16.mxu0 %v1546
    %1568 = vmatpush1.bf16.msra.mxu0 %v1545
    %1569 = vmatprep.subr.bf16.mxu0 %v1544
    %1570 = vmatpush1.bf16.msra.mxu0 %v1543
    %1571 = vmatprep.subr.bf16.mxu0 %v1542
    %1572 = vmatpush1.bf16.msra.mxu0 %v1541
    %1573 = vmatprep.subr.bf16.mxu0 %v1540
    %1574 = vmatpush1.bf16.msra.mxu0 %v1539
    %1575 = vmatprep.subr.bf16.mxu0 %v1538
    %1576 = vmatpush1.bf16.msra.mxu0 %v1537
    %1577 = vmatprep.subr.bf16.mxu0 %v1536
    %1578 = vmatpush1.bf16.msra.mxu0 %v1535
    %1579 = vmatprep.subr.bf16.mxu0 %v1534
    %1580 = vmatpush1.bf16.msra.mxu0 %v1533
    %1581 = vmatprep.subr.bf16.mxu0 0
    %1582 = vmatpush2.bf16.msra.mxu0 0
    %1583 = vmatprep.subr.bf16.mxu0 0
    %1584 = vmatpush2.bf16.msra.mxu0 0
    %1585 = vmatprep.subr.bf16.mxu0 0
    %1586 = vmatpush2.bf16.msra.mxu0 0
    %1587 = vmatprep.subr.bf16.mxu0 0
    %1588 = vmatpush2.bf16.msra.mxu0 0
    %1589 = vmatprep.subr.bf16.mxu0 0
    %1590 = vmatpush2.bf16.msra.mxu0 0
    %1591 = vmatprep.subr.bf16.mxu0 0
    %1592 = vmatpush2.bf16.msra.mxu0 0
    %1593 = vmatprep.subr.bf16.mxu0 0
    %1594 = vmatpush2.bf16.msra.mxu0 0
    %1595 = vmatprep.subr.bf16.mxu0 0
    %1596 = vmatpush2.bf16.msra.mxu0 0
    %1597 = vmatprep.mubr.bf16.mxu0 0
    %1598 = vmatmul.mubr.bf16.gmra.mxu0 %v1481
    %v1599 = vpop.f32.mrf.mxu0
    %v1600 = vadd.f32 0.0, %v1599
    %v1601 = vpop.f32.mrf.mxu0
    %v1602 = vadd.f32 0.0, %v1601
    %v1603 = vpop.f32.mrf.mxu0
    %v1604 = vadd.f32 0.0, %v1603
    %v1605 = vpop.f32.mrf.mxu0
    %v1606 = vadd.f32 0.0, %v1605
    %1607 = vmatprep.mubr.bf16.mxu0 0
    %1608 = vmatmul.mubr.bf16.gmra.mxu0 %v1482
    %v1609 = vpop.f32.mrf.mxu0
    %v1610 = vadd.f32 0.0, %v1609
    %v1611 = vpop.f32.mrf.mxu0
    %v1612 = vadd.f32 0.0, %v1611
    %v1613 = vpop.f32.mrf.mxu0
    %v1614 = vadd.f32 0.0, %v1613
    %v1615 = vpop.f32.mrf.mxu0
    %v1616 = vadd.f32 0.0, %v1615
    %1617 = vmatprep.mubr.bf16.mxu0 0
    %1618 = vmatmul.mubr.bf16.gmra.mxu0 %v1483
    %v1619 = vpop.f32.mrf.mxu0
    %v1620 = vadd.f32 0.0, %v1619
    %v1621 = vpop.f32.mrf.mxu0
    %v1622 = vadd.f32 0.0, %v1621
    %v1623 = vpop.f32.mrf.mxu0
    %v1624 = vadd.f32 0.0, %v1623
    %v1625 = vpop.f32.mrf.mxu0
    %v1626 = vadd.f32 0.0, %v1625
    %1627 = vmatprep.mubr.bf16.mxu0 0
    %1628 = vmatmul.mubr.bf16.gmra.mxu0 %v1484
    %v1629 = vpop.f32.mrf.mxu0
    %v1630 = vadd.f32 0.0, %v1629
    %v1631 = vpop.f32.mrf.mxu0
    %v1632 = vadd.f32 0.0, %v1631
    %v1633 = vpop.f32.mrf.mxu0
    %v1634 = vadd.f32 0.0, %v1633
    %v1635 = vpop.f32.mrf.mxu0
    %v1636 = vadd.f32 0.0, %v1635
    %1637 = vdwg.mxu0
    %v1638 = vpack.c.bf16 %v1606, %v1602
    %v1639 = vpack.c.bf16 %v1616, %v1612
    %v1640 = vpack.c.bf16 %v1626, %v1622
    %v1641 = vpack.c.bf16 %v1636, %v1632
    %1642 = vmatprep.subr.bf16.mxu0 0
    %1643 = vmatpush1.bf16.msra.mxu0 0
    %1644 = vmatprep.subr.bf16.mxu0 0
    %1645 = vmatpush1.bf16.msra.mxu0 0
    %1646 = vmatprep.subr.bf16.mxu0 0
    %1647 = vmatpush1.bf16.msra.mxu0 0
    %1648 = vmatprep.subr.bf16.mxu0 0
    %1649 = vmatpush1.bf16.msra.mxu0 0
    %1650 = vmatprep.subr.bf16.mxu0 0
    %1651 = vmatpush1.bf16.msra.mxu0 %v1641
    %1652 = vmatprep.subr.bf16.mxu0 0
    %1653 = vmatpush1.bf16.msra.mxu0 %v1640
    %1654 = vmatprep.subr.bf16.mxu0 0
    %1655 = vmatpush1.bf16.msra.mxu0 %v1639
    %1656 = vmatprep.subr.bf16.mxu0 0
    %1657 = vmatpush1.bf16.msra.mxu0 %v1638
    %1658 = vmatprep.subr.bf16.mxu0 0
    %1659 = vmatpush2.bf16.msra.mxu0 0
    %1660 = vmatprep.subr.bf16.mxu0 0
    %1661 = vmatpush2.bf16.msra.mxu0 0
    %1662 = vmatprep.subr.bf16.mxu0 0
    %1663 = vmatpush2.bf16.msra.mxu0 0
    %1664 = vmatprep.subr.bf16.mxu0 0
    %1665 = vmatpush2.bf16.msra.mxu0 0
    %1666 = vmatprep.subr.bf16.mxu0 0
    %1667 = vmatpush2.bf16.msra.mxu0 0
    %1668 = vmatprep.subr.bf16.mxu0 0
    %1669 = vmatpush2.bf16.msra.mxu0 0
    %1670 = vmatprep.subr.bf16.mxu0 0
    %1671 = vmatpush2.bf16.msra.mxu0 0
    %1672 = vmatprep.subr.bf16.mxu0 0
    %1673 = vmatpush2.bf16.msra.mxu0 0
    %1674 = vmatprep.mubr.bf16.mxu0 0
    %1675 = vmatmul.mubr.bf16.gmra.mxu0 %v581
    %v1676 = vpop.f32.mrf.mxu0
    %v1677 = vadd.f32 0.0, %v1676
    %v1678 = vpop.f32.mrf.mxu0
    %v1679 = vpop.f32.mrf.mxu0
    %v1680 = vadd.f32 0.0, %v1679
    %v1681 = vpop.f32.mrf.mxu0
    %1682 = vmatprep.mubr.bf16.mxu0 0
    %1683 = vmatmul.mubr.bf16.gmra.mxu0 %v584
    %v1684 = vpop.f32.mrf.mxu0
    %v1685 = vadd.f32 0.0, %v1684
    %v1686 = vpop.f32.mrf.mxu0
    %v1687 = vpop.f32.mrf.mxu0
    %v1688 = vadd.f32 0.0, %v1687
    %v1689 = vpop.f32.mrf.mxu0
    %1690 = vmatprep.mubr.bf16.mxu0 0
    %1691 = vmatmul.mubr.bf16.gmra.mxu0 %v587
    %v1692 = vpop.f32.mrf.mxu0
    %v1693 = vadd.f32 0.0, %v1692
    %v1694 = vpop.f32.mrf.mxu0
    %v1695 = vpop.f32.mrf.mxu0
    %v1696 = vadd.f32 0.0, %v1695
    %v1697 = vpop.f32.mrf.mxu0
    %1698 = vmatprep.mubr.bf16.mxu0 0
    %1699 = vmatmul.mubr.bf16.gmra.mxu0 %v590
    %v1700 = vpop.f32.mrf.mxu0
    %v1701 = vadd.f32 0.0, %v1700
    %v1702 = vpop.f32.mrf.mxu0
    %v1703 = vpop.f32.mrf.mxu0
    %v1704 = vadd.f32 0.0, %v1703
    %v1705 = vpop.f32.mrf.mxu0
    %1706 = vdwg.mxu0
    %v1707 = vmul.f32 %v660, %v1677
    %v1708 = vmul.f32 %v665, %v1680
    %v1709 = vmul.f32 %v670, %v1685
    %v1710 = vmul.f32 %v675, %v1688
    %v1711 = vmul.f32 %v680, %v1693
    %v1712 = vmul.f32 %v685, %v1696
    %v1713 = vmul.f32 %v690, %v1701
    %v1714 = vmul.f32 %v695, %v1704
    %v1715 = vadd.f32 %v1600, %v1707
    %v1716 = vadd.f32 %v1604, %v1708
    %v1717 = vadd.f32 %v1610, %v1709
    %v1718 = vadd.f32 %v1614, %v1710
    %v1719 = vadd.f32 %v1620, %v1711
    %v1720 = vadd.f32 %v1624, %v1712
    %v1721 = vadd.f32 %v1630, %v1713
    %v1722 = vadd.f32 %v1634, %v1714
    %v1723 = vlaneseq
    %v1724 = vshrl.u32 %v1723, 7
    %v1725 = vsub.s32 0, %v1724
    %v1726 = vrot.slane %v440, %v1725
    %v1727 = vadd.f32 %v1715, %v1726
    %v1728 = vadd.f32 %v1716, %v1726
    %v1729 = vadd.f32 %v1717, %v1726
    %v1730 = vadd.f32 %v1718, %v1726
    %v1731 = vadd.f32 %v1719, %v1726
    %v1732 = vadd.f32 %v1720, %v1726
    %v1733 = vadd.f32 %v1721, %v1726
    %v1734 = vadd.f32 %v1722, %v1726
    %vm1735 = vcmp.ge.f32.partialorder %v1727, 0.0
    %vm1736 = vcmp.ge.f32.partialorder %v1728, 0.0
    %vm1737 = vcmp.ge.f32.partialorder %v1729, 0.0
    %vm1738 = vcmp.ge.f32.partialorder %v1730, 0.0
    %vm1739 = vcmp.ge.f32.partialorder %v1731, 0.0
    %vm1740 = vcmp.ge.f32.partialorder %v1732, 0.0
    %vm1741 = vcmp.ge.f32.partialorder %v1733, 0.0
    %vm1742 = vcmp.ge.f32.partialorder %v1734, 0.0
    %v1743 = vlaneseq
    %v1744 = vshrl.u32 %v1743, 7
    %v1745 = vsub.s32 1, %v1744
    %v1746 = vrot.slane %v440, %v1745
    %v1747 = vmul.f32 %v1746, %v1727
    %v1748 = vmul.f32 %v1746, %v1728
    %v1749 = vmul.f32 %v1746, %v1729
    %v1750 = vmul.f32 %v1746, %v1730
    %v1751 = vmul.f32 %v1746, %v1731
    %v1752 = vmul.f32 %v1746, %v1732
    %v1753 = vmul.f32 %v1746, %v1733
    %v1754 = vmul.f32 %v1746, %v1734
    %v1755 = vsel %vm1735, %v1727, %v1747
    %v1756 = vsel %vm1736, %v1728, %v1748
    %v1757 = vsel %vm1737, %v1729, %v1749
    %v1758 = vsel %vm1738, %v1730, %v1750
    %v1759 = vsel %vm1739, %v1731, %v1751
    %v1760 = vsel %vm1740, %v1732, %v1752
    %v1761 = vsel %vm1741, %v1733, %v1753
    %v1762 = vsel %vm1742, %v1734, %v1754
    %v1763 = vlaneseq
    %v1764 = vshrl.u32 %v1763, 7
    %v1765 = vsub.s32 2, %v1764
    %v1766 = vrot.slane %v440, %v1765
    %v1767 = vmul.f32 %v1766, %v1755
    %v1768 = vmul.f32 %v1766, %v1756
    %v1769 = vmul.f32 %v1766, %v1757
    %v1770 = vmul.f32 %v1766, %v1758
    %v1771 = vmul.f32 %v1766, %v1759
    %v1772 = vmul.f32 %v1766, %v1760
    %v1773 = vmul.f32 %v1766, %v1761
    %v1774 = vmul.f32 %v1766, %v1762
    %v1775 = vlaneseq
    %v1776 = vshrl.u32 %v1775, 7
    %v1777 = vsub.s32 3, %v1776
    %v1778 = vrot.slane %v440, %v1777
    %v1779 = vadd.f32 %v1767, %v1778
    %v1780 = vadd.f32 %v1768, %v1778
    %v1781 = vadd.f32 %v1769, %v1778
    %v1782 = vadd.f32 %v1770, %v1778
    %v1783 = vadd.f32 %v1771, %v1778
    %v1784 = vadd.f32 %v1772, %v1778
    %v1785 = vadd.f32 %v1773, %v1778
    %v1786 = vadd.f32 %v1774, %v1778
    %v1787 = vadd.f32 %v1779, %v1780
    %v1788 = vadd.f32 %v1787, %v1781
    %v1789 = vadd.f32 %v1788, %v1782
    %v1790 = vadd.f32 %v1789, %v1783
    %v1791 = vadd.f32 %v1790, %v1784
    %v1792 = vadd.f32 %v1791, %v1785
    %v1793 = vadd.f32 %v1792, %v1786
    %v1794 = vrot.slane %v1793, 4
    %v1795 = vadd.f32 %v1793, %v1794
    %v1796 = vrot.slane %v1795, 2
    %v1797 = vadd.f32 %v1795, %v1796
    %v1798 = vrot.slane %v1797, 1
    %v1799 = vadd.f32 %v1797, %v1798
    %v1800 = vmul.f32 %v1799, 0.015625
    %vm1801 = vcmask 1040384
    %v1802 = vsel %vm1801, %v790, %v1126
    %vm1803 = vcmask 1041408
    %v1804 = vsel %vm1803, %v1802, %v1463
    %vm1805 = vcmask 1042432
    %v1806 = vsel %vm1805, %v1804, %v1800
    %1807 = vst [vmem:[%s7] sm:$0xf] %v1806
    // Predicated region
    $region38: #{gcn_forward.1} parent=1 // pred_check
      _
    $region39: #{gcn_forward.1} parent=1 // pred_check_branch
      %1809 = sbr.rel (0) target = $region41
    $region40: #{gcn_forward.1} parent=1 // pred_region
      _
    $region41: #{gcn_forward.1} parent=1 // pred_fallthru
      _
    // Predicated region
    $region42: #{gcn_forward.1} parent=1 // pred_check
      _
    $region43: #{gcn_forward.1} parent=1 // pred_check_branch
      %1811 = sbr.rel (0) target = $region45
    $region44: #{gcn_forward.1} parent=1 // pred_region
      _
    $region45: #{gcn_forward.1} parent=1 // pred_fallthru
      _
    %1812 = vsyncpa [#allocation3], 1
    %1813 = vsyncpa [#allocation5], 1

</llo_original>
